<compile_context>
chip_gen: v5e
topology: v5e:2x2
jax: 0.10.0
libtpu: 0.0.40
codegen_flags: <defaults>
</compile_context>

<pallas_src>
import functools
import math

import jax
import jax.numpy as jnp
from jax.experimental import pallas as pl
from jax.experimental.pallas import tpu as pltpu

NEG_INF = jnp.float32(-1e20)
LN_EPS = 1e-5


# --------------------------- in-kernel helpers ------------------------------

def _mha(xq, xkv, bias, wq, wkv, wo, *, num_heads, scale):
    """Multi-head attention for one batch element, heads unrolled in-kernel.

    xq: (Lq, E)  xkv: (Lk, E)  bias: (Lq, Lk) additive mask (0 / -1e20)
    wq: (E, E)   wkv: (E, 2E) = [Wk | Wv]   wo: (E, E)
    Returns (Lq, E), lane-dense (heads concatenated back onto the lane axis).
    """
    E = xq.shape[-1]
    D = E // num_heads
    # Fold 1/sqrt(embed_dim) into Q before the QK^T matmul (reference scales
    # the energy; masked entries hit exp-underflow either way).
    q = jnp.dot(xq, wq, preferred_element_type=jnp.float32) * scale
    kv = jnp.dot(xkv, wkv, preferred_element_type=jnp.float32)       # (Lk, 2E)

    outs = []
    for h in range(num_heads):                                       # static unroll
        qh = q[:, h * D:(h + 1) * D]
        kh = kv[:, h * D:(h + 1) * D]
        vh = kv[:, E + h * D:E + (h + 1) * D]
        e = jax.lax.dot_general(qh, kh, (((1,), (1,)), ((), ())),
                                preferred_element_type=jnp.float32)  # (Lq, Lk)
        e = e + bias
        e = e - jnp.max(e, axis=-1, keepdims=True)
        p = jnp.exp(e)
        inv = pl.reciprocal(jnp.sum(p, axis=-1, keepdims=True), approx=True)
        outs.append(jnp.dot(p * inv, vh, preferred_element_type=jnp.float32))
    o = jnp.concatenate(outs, axis=-1)                               # (Lq, E)
    return jnp.dot(o, wo, preferred_element_type=jnp.float32)


def _add_ln(x, y, w, b):
    """LayerNorm(x + y) over the last axis (biased variance, eps=1e-5)."""
    z = x + y
    mean = jnp.mean(z, axis=-1, keepdims=True)
    var = jnp.mean(jnp.square(z - mean), axis=-1, keepdims=True)
    return (z - mean) * jax.lax.rsqrt(var + LN_EPS) * w + b


# ------------------------------- kernels -------------------------------------

def _block_kernel(xq_ref, xkv_ref, bias_ref,
                  wq_ref, wkv_ref, wo_ref, ln1w_ref, ln1b_ref,
                  ff0w_ref, ff0b_ref, ff1w_ref, ff1b_ref, ln2w_ref, ln2b_ref,
                  o_ref, *, num_heads, scale):
    """Fused TransformerBlock: MHA -> add+LN -> FFN(ReLU) -> add+LN."""
    xq = xq_ref[0]                                                   # (Lq, E)
    attn = _mha(xq, xkv_ref[0], bias_ref[0],
                wq_ref[...], wkv_ref[...], wo_ref[...],
                num_heads=num_heads, scale=scale)
    x1 = _add_ln(attn, xq, ln1w_ref[...], ln1b_ref[...])
    y = jnp.dot(x1, ff0w_ref[...], preferred_element_type=jnp.float32) + ff0b_ref[...]
    y = jnp.maximum(y, 0.0)
    y = jnp.dot(y, ff1w_ref[...], preferred_element_type=jnp.float32) + ff1b_ref[...]
    o_ref[0] = _add_ln(x1, y, ln2w_ref[...], ln2b_ref[...]).astype(o_ref.dtype)


def _self_attn_norm_kernel(x_ref, bias_ref, wq_ref, wkv_ref, wo_ref,
                           lnw_ref, lnb_ref, o_ref, *, num_heads, scale):
    """Fused decoder self-attention + add+LayerNorm."""
    x = x_ref[0]
    attn = _mha(x, x, bias_ref[0], wq_ref[...], wkv_ref[...], wo_ref[...],
                num_heads=num_heads, scale=scale)
    o_ref[0] = _add_ln(attn, x, lnw_ref[...], lnb_ref[...]).astype(o_ref.dtype)


def _linear_bias_kernel(x_ref, w_ref, b_ref, o_ref):
    o_ref[...] = (jnp.dot(x_ref[...], w_ref[...], preferred_element_type=jnp.float32)
                  + b_ref[...]).astype(o_ref.dtype)


# ------------------------------- wrappers -------------------------------------

def _full_spec(a):
    # Whole-array block whose block index is constant across the grid:
    # Pallas fetches it once and keeps it resident (no per-step re-DMA).
    return pl.BlockSpec(a.shape, lambda b, _nd=a.ndim: (0,) * _nd)


def transformer_block(xq, xkv, bias, p, *, num_heads, embed_dim):
    """xq: (bs, Lq, E), xkv: (bs, Lk, E), bias: (bs, Lq, Lk) -> (bs, Lq, E)."""
    bs, lq, E = xq.shape
    lk = xkv.shape[1]
    scale = 1.0 / math.sqrt(embed_dim)   # reference scales by sqrt(embed_dim)
    return pl.pallas_call(
        functools.partial(_block_kernel, num_heads=num_heads, scale=scale),
        grid=(bs,),
        in_specs=[
            pl.BlockSpec((1, lq, E), lambda b: (b, 0, 0)),
            pl.BlockSpec((1, lk, E), lambda b: (b, 0, 0)),
            pl.BlockSpec((1, lq, lk), lambda b: (b, 0, 0)),
            _full_spec(p["wq"]), _full_spec(p["wkv"]), _full_spec(p["wo"]),
            _full_spec(p["ln1_w"]), _full_spec(p["ln1_b"]),
            _full_spec(p["ff0_w"]), _full_spec(p["ff0_b"]),
            _full_spec(p["ff1_w"]), _full_spec(p["ff1_b"]),
            _full_spec(p["ln2_w"]), _full_spec(p["ln2_b"]),
        ],
        out_specs=pl.BlockSpec((1, lq, E), lambda b: (b, 0, 0)),
        out_shape=jax.ShapeDtypeStruct((bs, lq, E), jnp.float32),
        compiler_params=pltpu.CompilerParams(dimension_semantics=("parallel",)),
    )(xq, xkv, bias,
      p["wq"], p["wkv"], p["wo"], p["ln1_w"], p["ln1_b"],
      p["ff0_w"], p["ff0_b"], p["ff1_w"], p["ff1_b"], p["ln2_w"], p["ln2_b"])


def self_attn_norm(x, bias, attn_p, ln_w, ln_b, *, num_heads, embed_dim):
    """x: (bs, L, E), bias: (bs, L, L) -> LN(MHA(x, x) + x)."""
    bs, l, E = x.shape
    scale = 1.0 / math.sqrt(embed_dim)
    return pl.pallas_call(
        functools.partial(_self_attn_norm_kernel, num_heads=num_heads, scale=scale),
        grid=(bs,),
        in_specs=[
            pl.BlockSpec((1, l, E), lambda b: (b, 0, 0)),
            pl.BlockSpec((1, l, l), lambda b: (b, 0, 0)),
            _full_spec(attn_p["wq"]), _full_spec(attn_p["wkv"]),
            _full_spec(attn_p["wo"]),
            _full_spec(ln_w), _full_spec(ln_b),
        ],
        out_specs=pl.BlockSpec((1, l, E), lambda b: (b, 0, 0)),
        out_shape=jax.ShapeDtypeStruct((bs, l, E), jnp.float32),
        compiler_params=pltpu.CompilerParams(dimension_semantics=("parallel",)),
    )(x, bias, attn_p["wq"], attn_p["wkv"], attn_p["wo"], ln_w, ln_b)


def final_linear(x, w, b, *, lane=128):
    """x: (N, K) @ w: (K, M) + b. Pads M up to a multiple of 128 so the store
    is lane-dense, then slices back in the wrapper."""
    N, _ = x.shape
    M = w.shape[1]
    Mp = ((M + lane - 1) // lane) * lane
    if Mp != M:
        w = jnp.pad(w, ((0, 0), (0, Mp - M)))
        b = jnp.pad(b, (0, Mp - M))
    out = pl.pallas_call(
        _linear_bias_kernel,
        out_shape=jax.ShapeDtypeStruct((N, Mp), jnp.float32),
    )(x, w, b.reshape(1, Mp))
    return out[:, :M]


# --------------------------- mask / param preparation ------------------------

def make_biases(src, trg, src_pad_idx):
    """Additive attention biases (0 keep / -1e20 drop), matching masked_fill."""
    bs, ls = src.shape
    _, lt = trg.shape
    src_row = jnp.where(src != src_pad_idx, 0.0, NEG_INF).astype(jnp.float32)
    enc_bias = jnp.broadcast_to(src_row[:, None, :], (bs, ls, ls))
    cross_bias = jnp.broadcast_to(src_row[:, None, :], (bs, lt, ls))
    causal = jnp.tril(jnp.ones((lt, lt), jnp.float32))
    trg_bias = jnp.broadcast_to(
        jnp.where(causal == 0, NEG_INF, 0.0)[None], (bs, lt, lt)).astype(jnp.float32)
    return enc_bias, cross_bias, trg_bias


def prepare_params(params):
    """Convert raw params into the fused-kernel layout (one-time, outside jit):
       - Wk/Wv concatenated into a single (E, 2E) weight,
       - LayerNorm / bias vectors reshaped to (1, dim) rows."""
    row = lambda v: v.reshape(1, -1)

    def attn(p):
        return dict(wq=p["wq"],
                    wkv=jnp.concatenate([p["wk"], p["wv"]], axis=1),
                    wo=p["wo"])

    def block(p):
        a = attn(p["attn"])
        return dict(wq=a["wq"], wkv=a["wkv"], wo=a["wo"],
                    ln1_w=row(p["ln1_w"]), ln1_b=row(p["ln1_b"]),
                    ff0_w=p["ff0_w"], ff0_b=row(p["ff0_b"]),
                    ff1_w=p["ff1_w"], ff1_b=row(p["ff1_b"]),
                    ln2_w=row(p["ln2_w"]), ln2_b=row(p["ln2_b"]))

    enc = dict(word_emb=params["encoder"]["word_emb"],
               pos_emb=params["encoder"]["pos_emb"],
               layers=[block(lp) for lp in params["encoder"]["layers"]])
    dec = dict(word_emb=params["decoder"]["word_emb"],
               pos_emb=params["decoder"]["pos_emb"],
               layers=[dict(self_attn=attn(lp["self_attn"]),
                            norm_w=row(lp["norm_w"]), norm_b=row(lp["norm_b"]),
                            block=block(lp["block"]))
                       for lp in params["decoder"]["layers"]],
               fc_w=params["decoder"]["fc_w"], fc_b=params["decoder"]["fc_b"])
    return dict(encoder=enc, decoder=dec)


# ------------------------------ Pallas forward --------------------------------

def transformer_fwd_pallas(prepared, src, trg, cfg):
    E, H = cfg["embed_dim"], cfg["num_heads"]
    bs, ls = src.shape
    _, lt = trg.shape
    enc_bias, cross_bias, trg_bias = make_biases(src, trg, cfg["src_pad_idx"])

    ep, dp = prepared["encoder"], prepared["decoder"]

    # Embedding gathers stay in plain JAX (dropout p=0 -> identity).
    x = ep["word_emb"][src] + ep["pos_emb"][jnp.arange(ls)][None]
    for lp in ep["layers"]:
        x = transformer_block(x, x, enc_bias, lp, num_heads=H, embed_dim=E)
    enc_out = x

    y = dp["word_emb"][trg] + dp["pos_emb"][jnp.arange(lt)][None]
    for lp in dp["layers"]:
        y = self_attn_norm(y, trg_bias, lp["self_attn"], lp["norm_w"], lp["norm_b"],
                           num_heads=H, embed_dim=E)
        y = transformer_block(y, enc_out, cross_bias, lp["block"],
                              num_heads=H, embed_dim=E)
    out = final_linear(y.reshape(-1, E), dp["fc_w"], dp["fc_b"])
    return out.reshape(bs, lt, -1)


# ----------------------- pure-JAX reference (for checking) --------------------

def ref_add_ln(x, y, w, b, eps=LN_EPS):
    z = x + y
    mean = z.mean(-1, keepdims=True)
    var = ((z - mean) ** 2).mean(-1, keepdims=True)
    return (z - mean) / jnp.sqrt(var + eps) * w + b


def ref_mha(x_q, x_kv, mask, p, num_heads, embed_dim):
    bs, lq, E = x_q.shape
    lk = x_kv.shape[1]
    D = E // num_heads
    q = (x_q @ p["wq"]).reshape(bs, lq, num_heads, D).transpose(0, 2, 1, 3)
    k = (x_kv @ p["wk"]).reshape(bs, lk, num_heads, D).transpose(0, 2, 1, 3)
    v = (x_kv @ p["wv"]).reshape(bs, lk, num_heads, D).transpose(0, 2, 1, 3)
    energy = jnp.einsum("bhqd,bhkd->bhqk", q, k)
    energy = jnp.where(mask == 0, NEG_INF, energy)
    att = jax.nn.softmax(energy / math.sqrt(embed_dim), axis=-1)
    o = jnp.einsum("bhqk,bhkd->bhqd", att, v)
    o = o.transpose(0, 2, 1, 3).reshape(bs, lq, E)
    return o @ p["wo"]


def ref_block(xq, xkv, mask, p, num_heads, embed_dim):
    attn = ref_mha(xq, xkv, mask, p["attn"], num_heads, embed_dim)
    x1 = ref_add_ln(attn, xq, p["ln1_w"], p["ln1_b"])
    y = jnp.maximum(x1 @ p["ff0_w"] + p["ff0_b"], 0.0)
    y = y @ p["ff1_w"] + p["ff1_b"]
    return ref_add_ln(x1, y, p["ln2_w"], p["ln2_b"])


def transformer_fwd_ref(params, src, trg, cfg):
    E, H = cfg["embed_dim"], cfg["num_heads"]
    bs, ls = src.shape
    _, lt = trg.shape
    src_mask = (src != cfg["src_pad_idx"]).astype(jnp.float32)[:, None, None, :]
    trg_mask = jnp.broadcast_to(
        jnp.tril(jnp.ones((lt, lt), jnp.float32))[None, None], (bs, 1, lt, lt))

    ep, dp = params["encoder"], params["decoder"]
    x = ep["word_emb"][src] + ep["pos_emb"][jnp.arange(ls)][None]
    for lp in ep["layers"]:
        x = ref_block(x, x, src_mask, lp, H, E)
    enc_out = x

    y = dp["word_emb"][trg] + dp["pos_emb"][jnp.arange(lt)][None]
    for lp in dp["layers"]:
        attn = ref_mha(y, y, trg_mask, lp["self_attn"], H, E)
        q = ref_add_ln(attn, y, lp["norm_w"], lp["norm_b"])
        y = ref_block(q, enc_out, src_mask, lp["block"], H, E)
    return y @ dp["fc_w"] + dp["fc_b"]


# ----------------------------- parameter init ---------------------------------

def init_params(key, cfg):
    keys = iter(jax.random.split(key, 512))
    E = cfg["embed_dim"]
    F = cfg["forward_expansion"] * E

    def w(shape, scale=0.05):
        return (scale * jax.random.normal(next(keys), shape)).astype(jnp.float32)

    def attn_params():
        return dict(wq=w((E, E)), wk=w((E, E)), wv=w((E, E)), wo=w((E, E)))

    def block_params():
        return dict(
            attn=attn_params(),
            ln1_w=(1.0 + w((E,), 0.1)), ln1_b=w((E,), 0.1),
            ln2_w=(1.0 + w((E,), 0.1)), ln2_b=w((E,), 0.1),
            ff0_w=w((E, F)), ff0_b=w((F,), 0.1),
            ff1_w=w((F, E)), ff1_b=w((E,), 0.1))

    def dec_block_params():
        return dict(
            self_attn=attn_params(),
            norm_w=(1.0 + w((E,), 0.1)), norm_b=w((E,), 0.1),
            block=block_params())

    encoder = dict(
        word_emb=w((cfg["src_vocab"], E)),
        pos_emb=w((cfg["max_length"], E)),
        layers=[block_params() for _ in range(cfg["num_layers"])])
    decoder = dict(
        word_emb=w((cfg["trg_vocab"], E)),
        pos_emb=w((cfg["max_length"], E)),
        layers=[dec_block_params() for _ in range(cfg["num_layers"])],
        fc_w=w((E, cfg["trg_vocab"])),
        fc_b=w((cfg["trg_vocab"],), 0.1))
    return dict(encoder=encoder, decoder=decoder)


# --------------------------------- main ----------------------------------------

if __name__ == "__main__":
    cfg = dict(src_vocab=50, trg_vocab=48, src_pad_idx=0, trg_pad_idx=0,
               embed_dim=32, num_layers=2, forward_expansion=4, num_heads=4,
               max_length=16)

    key = jax.random.PRNGKey(0)
    kp, ks, kt = jax.random.split(key, 3)
    params = init_params(kp, cfg)
    prepared = prepare_params(params)   # one-time fused layout (Wkv concat, row biases)

    src = jax.random.randint(ks, (2, 8), 0, cfg["src_vocab"], dtype=jnp.int32)
    trg = jax.random.randint(kt, (2, 8), 0, cfg["trg_vocab"], dtype=jnp.int32)

    fwd = jax.jit(lambda p, s, t: transformer_fwd_pallas(p, s, t, cfg))
    out = jax.block_until_ready(fwd(prepared, src, trg))

    ref = transformer_fwd_ref(params, src, trg, cfg)
    assert out.shape == (2, 8, cfg["trg_vocab"]), out.shape
    max_err = float(jnp.max(jnp.abs(out - ref)))
    # Slightly looser tolerance than f64-exact: approx-EUP reciprocal in softmax.
    assert jnp.allclose(out, ref, atol=2e-3, rtol=2e-3), max_err

    # NOTE: at larger model sizes, cast matmul operands to bf16 (keep f32 accum
    # and f32 softmax/LayerNorm) on v6e/v7x; kept f32 here for the tiny test.
    print("KERNEL_OK")
</pallas_src>

<mosaic_0001>
module attributes {stable_mosaic.version = 11 : i64} {
  func.func @_block_kernel(%arg0: i32, %arg1: memref<1x8x32xf32, #tpu.memory_space<vmem>>, %arg2: memref<1x8x32xf32, #tpu.memory_space<vmem>>, %arg3: memref<1x8x8xf32, #tpu.memory_space<vmem>>, %arg4: memref<32x32xf32, #tpu.memory_space<vmem>>, %arg5: memref<32x64xf32, #tpu.memory_space<vmem>>, %arg6: memref<32x32xf32, #tpu.memory_space<vmem>>, %arg7: memref<1x32xf32, #tpu.memory_space<vmem>>, %arg8: memref<1x32xf32, #tpu.memory_space<vmem>>, %arg9: memref<32x128xf32, #tpu.memory_space<vmem>>, %arg10: memref<1x128xf32, #tpu.memory_space<vmem>>, %arg11: memref<128x32xf32, #tpu.memory_space<vmem>>, %arg12: memref<1x32xf32, #tpu.memory_space<vmem>>, %arg13: memref<1x32xf32, #tpu.memory_space<vmem>>, %arg14: memref<1x32xf32, #tpu.memory_space<vmem>>, %arg15: memref<1x8x32xf32, #tpu.memory_space<vmem>>) attributes {dimension_semantics = [#tpu.dimension_semantics<parallel>], iteration_bounds = array<i64: 2>, scalar_prefetch = 0 : i64, scratch_operands = 0 : i64, tpu.core_type = #tpu.core_type<tc>, window_params = [{transform_indices = @transform_0, window_bounds = array<i64: 1, 8, 32>}, {transform_indices = @transform_1, window_bounds = array<i64: 1, 8, 32>}, {transform_indices = @transform_2, window_bounds = array<i64: 1, 8, 8>}, {pipeline_mode = #tpu.pipeline_mode<synchronous>, transform_indices = @transform_3, window_bounds = array<i64: 32, 32>}, {pipeline_mode = #tpu.pipeline_mode<synchronous>, transform_indices = @transform_4, window_bounds = array<i64: 32, 64>}, {pipeline_mode = #tpu.pipeline_mode<synchronous>, transform_indices = @transform_5, window_bounds = array<i64: 32, 32>}, {pipeline_mode = #tpu.pipeline_mode<synchronous>, transform_indices = @transform_6, window_bounds = array<i64: 1, 32>}, {pipeline_mode = #tpu.pipeline_mode<synchronous>, transform_indices = @transform_7, window_bounds = array<i64: 1, 32>}, {pipeline_mode = #tpu.pipeline_mode<synchronous>, transform_indices = @transform_8, window_bounds = array<i64: 32, 128>}, {pipeline_mode = #tpu.pipeline_mode<synchronous>, transform_indices = @transform_9, window_bounds = array<i64: 1, 128>}, {pipeline_mode = #tpu.pipeline_mode<synchronous>, transform_indices = @transform_10, window_bounds = array<i64: 128, 32>}, {pipeline_mode = #tpu.pipeline_mode<synchronous>, transform_indices = @transform_11, window_bounds = array<i64: 1, 32>}, {pipeline_mode = #tpu.pipeline_mode<synchronous>, transform_indices = @transform_12, window_bounds = array<i64: 1, 32>}, {pipeline_mode = #tpu.pipeline_mode<synchronous>, transform_indices = @transform_13, window_bounds = array<i64: 1, 32>}, {transform_indices = @transform_14, window_bounds = array<i64: 1, 8, 32>}]} {
    %c0 = arith.constant 0 : index
    %c0_0 = arith.constant 0 : index
    %c0_1 = arith.constant 0 : index
    %0 = vector.load %arg1[%c0, %c0_0, %c0_1] : memref<1x8x32xf32, #tpu.memory_space<vmem>>, vector<1x8x32xf32>
    %1 = vector.shape_cast %0 : vector<1x8x32xf32> to vector<8x32xf32>
    %c0_2 = arith.constant 0 : index
    %c0_3 = arith.constant 0 : index
    %c0_4 = arith.constant 0 : index
    %2 = vector.load %arg2[%c0_2, %c0_3, %c0_4] : memref<1x8x32xf32, #tpu.memory_space<vmem>>, vector<1x8x32xf32>
    %3 = vector.shape_cast %2 : vector<1x8x32xf32> to vector<8x32xf32>
    %c0_5 = arith.constant 0 : index
    %c0_6 = arith.constant 0 : index
    %c0_7 = arith.constant 0 : index
    %4 = vector.load %arg3[%c0_5, %c0_6, %c0_7] : memref<1x8x8xf32, #tpu.memory_space<vmem>>, vector<1x8x8xf32>
    %5 = vector.shape_cast %4 : vector<1x8x8xf32> to vector<8x8xf32>
    %c0_8 = arith.constant 0 : index
    %c0_9 = arith.constant 0 : index
    %6 = vector.load %arg4[%c0_8, %c0_9] : memref<32x32xf32, #tpu.memory_space<vmem>>, vector<32x32xf32>
    %c0_10 = arith.constant 0 : index
    %c0_11 = arith.constant 0 : index
    %7 = vector.load %arg5[%c0_10, %c0_11] : memref<32x64xf32, #tpu.memory_space<vmem>>, vector<32x64xf32>
    %c0_12 = arith.constant 0 : index
    %c0_13 = arith.constant 0 : index
    %8 = vector.load %arg6[%c0_12, %c0_13] : memref<32x32xf32, #tpu.memory_space<vmem>>, vector<32x32xf32>
    %cst = arith.constant dense<0.000000e+00> : vector<8x32xf32>
    %9 = tpu.matmul %1, %6, %cst {dimension_numbers = #tpu.dot_dimension_numbers<[1], [0], [0], [1], [0, 0, 1, 1], [], []>} : vector<8x32xf32>, vector<32x32xf32>, vector<8x32xf32> -> vector<8x32xf32>
    %cst_14 = arith.constant 0.176776692 : f32
    %10 = vector.broadcast %cst_14 : f32 to vector<8x32xf32>
    %11 = arith.mulf %9, %10 : vector<8x32xf32>
    %cst_15 = arith.constant dense<0.000000e+00> : vector<8x64xf32>
    %12 = tpu.matmul %3, %7, %cst_15 {dimension_numbers = #tpu.dot_dimension_numbers<[1], [0], [0], [1], [0, 0, 1, 1], [], []>} : vector<8x32xf32>, vector<32x64xf32>, vector<8x64xf32> -> vector<8x64xf32>
    %13 = vector.extract_strided_slice %11 {offsets = [0, 0], sizes = [8, 8], strides = [1, 1]} : vector<8x32xf32> to vector<8x8xf32>
    %14 = vector.extract_strided_slice %12 {offsets = [0, 0], sizes = [8, 8], strides = [1, 1]} : vector<8x64xf32> to vector<8x8xf32>
    %15 = vector.extract_strided_slice %12 {offsets = [0, 32], sizes = [8, 8], strides = [1, 1]} : vector<8x64xf32> to vector<8x8xf32>
    %cst_16 = arith.constant dense<0.000000e+00> : vector<8x8xf32>
    %16 = tpu.matmul %13, %14, %cst_16 {dimension_numbers = #tpu.dot_dimension_numbers<[1], [1], [0], [0], [0, 0, 1, 0], [], []>} : vector<8x8xf32>, vector<8x8xf32>, vector<8x8xf32> -> vector<8x8xf32>
    %17 = arith.addf %16, %5 : vector<8x8xf32>
    %cst_17 = arith.constant dense<0xFF800000> : vector<8xf32>
    %18 = vector.multi_reduction <maximumf>, %17, %cst_17 [1] : vector<8x8xf32> to vector<8xf32>
    %19 = vector.shape_cast %18 : vector<8xf32> to vector<8x1xf32>
    %20 = vector.broadcast %19 : vector<8x1xf32> to vector<8x8xf32>
    %21 = arith.subf %17, %20 : vector<8x8xf32>
    %22 = math.exp %21 : vector<8x8xf32>
    %cst_18 = arith.constant dense<0.000000e+00> : vector<8xf32>
    %23 = vector.multi_reduction <add>, %22, %cst_18 [1] : vector<8x8xf32> to vector<8xf32>
    %24 = vector.shape_cast %23 : vector<8xf32> to vector<8x1xf32>
    %25 = tpu.reciprocal %24 {approx = true} : vector<8x1xf32> -> vector<8x1xf32>
    %26 = vector.broadcast %25 : vector<8x1xf32> to vector<8x8xf32>
    %27 = arith.mulf %22, %26 : vector<8x8xf32>
    %cst_19 = arith.constant dense<0.000000e+00> : vector<8x8xf32>
    %28 = tpu.matmul %27, %15, %cst_19 {dimension_numbers = #tpu.dot_dimension_numbers<[1], [0], [0], [1], [0, 0, 1, 1], [], []>} : vector<8x8xf32>, vector<8x8xf32>, vector<8x8xf32> -> vector<8x8xf32>
    %29 = vector.extract_strided_slice %11 {offsets = [0, 8], sizes = [8, 8], strides = [1, 1]} : vector<8x32xf32> to vector<8x8xf32>
    %30 = vector.extract_strided_slice %12 {offsets = [0, 8], sizes = [8, 8], strides = [1, 1]} : vector<8x64xf32> to vector<8x8xf32>
    %31 = vector.extract_strided_slice %12 {offsets = [0, 40], sizes = [8, 8], strides = [1, 1]} : vector<8x64xf32> to vector<8x8xf32>
    %cst_20 = arith.constant dense<0.000000e+00> : vector<8x8xf32>
    %32 = tpu.matmul %29, %30, %cst_20 {dimension_numbers = #tpu.dot_dimension_numbers<[1], [1], [0], [0], [0, 0, 1, 0], [], []>} : vector<8x8xf32>, vector<8x8xf32>, vector<8x8xf32> -> vector<8x8xf32>
    %33 = arith.addf %32, %5 : vector<8x8xf32>
    %cst_21 = arith.constant dense<0xFF800000> : vector<8xf32>
    %34 = vector.multi_reduction <maximumf>, %33, %cst_21 [1] : vector<8x8xf32> to vector<8xf32>
    %35 = vector.shape_cast %34 : vector<8xf32> to vector<8x1xf32>
    %36 = vector.broadcast %35 : vector<8x1xf32> to vector<8x8xf32>
    %37 = arith.subf %33, %36 : vector<8x8xf32>
    %38 = math.exp %37 : vector<8x8xf32>
    %cst_22 = arith.constant dense<0.000000e+00> : vector<8xf32>
    %39 = vector.multi_reduction <add>, %38, %cst_22 [1] : vector<8x8xf32> to vector<8xf32>
    %40 = vector.shape_cast %39 : vector<8xf32> to vector<8x1xf32>
    %41 = tpu.reciprocal %40 {approx = true} : vector<8x1xf32> -> vector<8x1xf32>
    %42 = vector.broadcast %41 : vector<8x1xf32> to vector<8x8xf32>
    %43 = arith.mulf %38, %42 : vector<8x8xf32>
    %cst_23 = arith.constant dense<0.000000e+00> : vector<8x8xf32>
    %44 = tpu.matmul %43, %31, %cst_23 {dimension_numbers = #tpu.dot_dimension_numbers<[1], [0], [0], [1], [0, 0, 1, 1], [], []>} : vector<8x8xf32>, vector<8x8xf32>, vector<8x8xf32> -> vector<8x8xf32>
    %45 = vector.extract_strided_slice %11 {offsets = [0, 16], sizes = [8, 8], strides = [1, 1]} : vector<8x32xf32> to vector<8x8xf32>
    %46 = vector.extract_strided_slice %12 {offsets = [0, 16], sizes = [8, 8], strides = [1, 1]} : vector<8x64xf32> to vector<8x8xf32>
    %47 = vector.extract_strided_slice %12 {offsets = [0, 48], sizes = [8, 8], strides = [1, 1]} : vector<8x64xf32> to vector<8x8xf32>
    %cst_24 = arith.constant dense<0.000000e+00> : vector<8x8xf32>
    %48 = tpu.matmul %45, %46, %cst_24 {dimension_numbers = #tpu.dot_dimension_numbers<[1], [1], [0], [0], [0, 0, 1, 0], [], []>} : vector<8x8xf32>, vector<8x8xf32>, vector<8x8xf32> -> vector<8x8xf32>
    %49 = arith.addf %48, %5 : vector<8x8xf32>
    %cst_25 = arith.constant dense<0xFF800000> : vector<8xf32>
    %50 = vector.multi_reduction <maximumf>, %49, %cst_25 [1] : vector<8x8xf32> to vector<8xf32>
    %51 = vector.shape_cast %50 : vector<8xf32> to vector<8x1xf32>
    %52 = vector.broadcast %51 : vector<8x1xf32> to vector<8x8xf32>
    %53 = arith.subf %49, %52 : vector<8x8xf32>
    %54 = math.exp %53 : vector<8x8xf32>
    %cst_26 = arith.constant dense<0.000000e+00> : vector<8xf32>
    %55 = vector.multi_reduction <add>, %54, %cst_26 [1] : vector<8x8xf32> to vector<8xf32>
    %56 = vector.shape_cast %55 : vector<8xf32> to vector<8x1xf32>
    %57 = tpu.reciprocal %56 {approx = true} : vector<8x1xf32> -> vector<8x1xf32>
    %58 = vector.broadcast %57 : vector<8x1xf32> to vector<8x8xf32>
    %59 = arith.mulf %54, %58 : vector<8x8xf32>
    %cst_27 = arith.constant dense<0.000000e+00> : vector<8x8xf32>
    %60 = tpu.matmul %59, %47, %cst_27 {dimension_numbers = #tpu.dot_dimension_numbers<[1], [0], [0], [1], [0, 0, 1, 1], [], []>} : vector<8x8xf32>, vector<8x8xf32>, vector<8x8xf32> -> vector<8x8xf32>
    %61 = vector.extract_strided_slice %11 {offsets = [0, 24], sizes = [8, 8], strides = [1, 1]} : vector<8x32xf32> to vector<8x8xf32>
    %62 = vector.extract_strided_slice %12 {offsets = [0, 24], sizes = [8, 8], strides = [1, 1]} : vector<8x64xf32> to vector<8x8xf32>
    %63 = vector.extract_strided_slice %12 {offsets = [0, 56], sizes = [8, 8], strides = [1, 1]} : vector<8x64xf32> to vector<8x8xf32>
    %cst_28 = arith.constant dense<0.000000e+00> : vector<8x8xf32>
    %64 = tpu.matmul %61, %62, %cst_28 {dimension_numbers = #tpu.dot_dimension_numbers<[1], [1], [0], [0], [0, 0, 1, 0], [], []>} : vector<8x8xf32>, vector<8x8xf32>, vector<8x8xf32> -> vector<8x8xf32>
    %65 = arith.addf %64, %5 : vector<8x8xf32>
    %cst_29 = arith.constant dense<0xFF800000> : vector<8xf32>
    %66 = vector.multi_reduction <maximumf>, %65, %cst_29 [1] : vector<8x8xf32> to vector<8xf32>
    %67 = vector.shape_cast %66 : vector<8xf32> to vector<8x1xf32>
    %68 = vector.broadcast %67 : vector<8x1xf32> to vector<8x8xf32>
    %69 = arith.subf %65, %68 : vector<8x8xf32>
    %70 = math.exp %69 : vector<8x8xf32>
    %cst_30 = arith.constant dense<0.000000e+00> : vector<8xf32>
    %71 = vector.multi_reduction <add>, %70, %cst_30 [1] : vector<8x8xf32> to vector<8xf32>
    %72 = vector.shape_cast %71 : vector<8xf32> to vector<8x1xf32>
    %73 = tpu.reciprocal %72 {approx = true} : vector<8x1xf32> -> vector<8x1xf32>
    %74 = vector.broadcast %73 : vector<8x1xf32> to vector<8x8xf32>
    %75 = arith.mulf %70, %74 : vector<8x8xf32>
    %cst_31 = arith.constant dense<0.000000e+00> : vector<8x8xf32>
    %76 = tpu.matmul %75, %63, %cst_31 {dimension_numbers = #tpu.dot_dimension_numbers<[1], [0], [0], [1], [0, 0, 1, 1], [], []>} : vector<8x8xf32>, vector<8x8xf32>, vector<8x8xf32> -> vector<8x8xf32>
    %77 = tpu.concatenate %28, %44, %60, %76 in 1 : vector<8x8xf32>, vector<8x8xf32>, vector<8x8xf32>, vector<8x8xf32> -> vector<8x32xf32>
    %cst_32 = arith.constant dense<0.000000e+00> : vector<8x32xf32>
    %78 = tpu.matmul %77, %8, %cst_32 {dimension_numbers = #tpu.dot_dimension_numbers<[1], [0], [0], [1], [0, 0, 1, 1], [], []>} : vector<8x32xf32>, vector<32x32xf32>, vector<8x32xf32> -> vector<8x32xf32>
    %c0_33 = arith.constant 0 : index
    %c0_34 = arith.constant 0 : index
    %79 = vector.load %arg7[%c0_33, %c0_34] : memref<1x32xf32, #tpu.memory_space<vmem>>, vector<1x32xf32>
    %c0_35 = arith.constant 0 : index
    %c0_36 = arith.constant 0 : index
    %80 = vector.load %arg8[%c0_35, %c0_36] : memref<1x32xf32, #tpu.memory_space<vmem>>, vector<1x32xf32>
    %81 = arith.addf %78, %1 : vector<8x32xf32>
    %cst_37 = arith.constant dense<0.000000e+00> : vector<8xf32>
    %82 = vector.multi_reduction <add>, %81, %cst_37 [1] : vector<8x32xf32> to vector<8xf32>
    %83 = vector.shape_cast %82 : vector<8xf32> to vector<8x1xf32>
    %cst_38 = arith.constant 3.200000e+01 : f32
    %84 = vector.broadcast %cst_38 : f32 to vector<8x1xf32>
    %85 = arith.divf %83, %84 : vector<8x1xf32>
    %86 = vector.broadcast %85 : vector<8x1xf32> to vector<8x32xf32>
    %87 = arith.subf %81, %86 : vector<8x32xf32>
    %88 = arith.mulf %87, %87 : vector<8x32xf32>
    %cst_39 = arith.constant dense<0.000000e+00> : vector<8xf32>
    %89 = vector.multi_reduction <add>, %88, %cst_39 [1] : vector<8x32xf32> to vector<8xf32>
    %90 = vector.shape_cast %89 : vector<8xf32> to vector<8x1xf32>
    %cst_40 = arith.constant 3.200000e+01 : f32
    %91 = vector.broadcast %cst_40 : f32 to vector<8x1xf32>
    %92 = arith.divf %90, %91 : vector<8x1xf32>
    %93 = vector.broadcast %85 : vector<8x1xf32> to vector<8x32xf32>
    %94 = arith.subf %81, %93 : vector<8x32xf32>
    %cst_41 = arith.constant 9.99999974E-6 : f32
    %95 = vector.broadcast %cst_41 : f32 to vector<8x1xf32>
    %96 = arith.addf %92, %95 : vector<8x1xf32>
    %97 = math.rsqrt %96 : vector<8x1xf32>
    %98 = vector.broadcast %97 : vector<8x1xf32> to vector<8x32xf32>
    %99 = arith.mulf %94, %98 : vector<8x32xf32>
    %100 = vector.broadcast %79 : vector<1x32xf32> to vector<8x32xf32>
    %101 = arith.mulf %99, %100 : vector<8x32xf32>
    %102 = vector.broadcast %80 : vector<1x32xf32> to vector<8x32xf32>
    %103 = arith.addf %101, %102 : vector<8x32xf32>
    %c0_42 = arith.constant 0 : index
    %c0_43 = arith.constant 0 : index
    %104 = vector.load %arg9[%c0_42, %c0_43] : memref<32x128xf32, #tpu.memory_space<vmem>>, vector<32x128xf32>
    %cst_44 = arith.constant dense<0.000000e+00> : vector<8x128xf32>
    %105 = tpu.matmul %103, %104, %cst_44 {dimension_numbers = #tpu.dot_dimension_numbers<[1], [0], [0], [1], [0, 0, 1, 1], [], []>} : vector<8x32xf32>, vector<32x128xf32>, vector<8x128xf32> -> vector<8x128xf32>
    %c0_45 = arith.constant 0 : index
    %c0_46 = arith.constant 0 : index
    %106 = vector.load %arg10[%c0_45, %c0_46] : memref<1x128xf32, #tpu.memory_space<vmem>>, vector<1x128xf32>
    %107 = vector.broadcast %106 : vector<1x128xf32> to vector<8x128xf32>
    %108 = arith.addf %105, %107 : vector<8x128xf32>
    %cst_47 = arith.constant 0.000000e+00 : f32
    %109 = vector.broadcast %cst_47 : f32 to vector<8x128xf32>
    %110 = arith.maximumf %108, %109 : vector<8x128xf32>
    %c0_48 = arith.constant 0 : index
    %c0_49 = arith.constant 0 : index
    %111 = vector.load %arg11[%c0_48, %c0_49] : memref<128x32xf32, #tpu.memory_space<vmem>>, vector<128x32xf32>
    %cst_50 = arith.constant dense<0.000000e+00> : vector<8x32xf32>
    %112 = tpu.matmul %110, %111, %cst_50 {dimension_numbers = #tpu.dot_dimension_numbers<[1], [0], [0], [1], [0, 0, 1, 1], [], []>} : vector<8x128xf32>, vector<128x32xf32>, vector<8x32xf32> -> vector<8x32xf32>
    %c0_51 = arith.constant 0 : index
    %c0_52 = arith.constant 0 : index
    %113 = vector.load %arg12[%c0_51, %c0_52] : memref<1x32xf32, #tpu.memory_space<vmem>>, vector<1x32xf32>
    %114 = vector.broadcast %113 : vector<1x32xf32> to vector<8x32xf32>
    %115 = arith.addf %112, %114 : vector<8x32xf32>
    %c0_53 = arith.constant 0 : index
    %c0_54 = arith.constant 0 : index
    %116 = vector.load %arg13[%c0_53, %c0_54] : memref<1x32xf32, #tpu.memory_space<vmem>>, vector<1x32xf32>
    %c0_55 = arith.constant 0 : index
    %c0_56 = arith.constant 0 : index
    %117 = vector.load %arg14[%c0_55, %c0_56] : memref<1x32xf32, #tpu.memory_space<vmem>>, vector<1x32xf32>
    %118 = arith.addf %103, %115 : vector<8x32xf32>
    %cst_57 = arith.constant dense<0.000000e+00> : vector<8xf32>
    %119 = vector.multi_reduction <add>, %118, %cst_57 [1] : vector<8x32xf32> to vector<8xf32>
    %120 = vector.shape_cast %119 : vector<8xf32> to vector<8x1xf32>
    %cst_58 = arith.constant 3.200000e+01 : f32
    %121 = vector.broadcast %cst_58 : f32 to vector<8x1xf32>
    %122 = arith.divf %120, %121 : vector<8x1xf32>
    %123 = vector.broadcast %122 : vector<8x1xf32> to vector<8x32xf32>
    %124 = arith.subf %118, %123 : vector<8x32xf32>
    %125 = arith.mulf %124, %124 : vector<8x32xf32>
    %cst_59 = arith.constant dense<0.000000e+00> : vector<8xf32>
    %126 = vector.multi_reduction <add>, %125, %cst_59 [1] : vector<8x32xf32> to vector<8xf32>
    %127 = vector.shape_cast %126 : vector<8xf32> to vector<8x1xf32>
    %cst_60 = arith.constant 3.200000e+01 : f32
    %128 = vector.broadcast %cst_60 : f32 to vector<8x1xf32>
    %129 = arith.divf %127, %128 : vector<8x1xf32>
    %130 = vector.broadcast %122 : vector<8x1xf32> to vector<8x32xf32>
    %131 = arith.subf %118, %130 : vector<8x32xf32>
    %cst_61 = arith.constant 9.99999974E-6 : f32
    %132 = vector.broadcast %cst_61 : f32 to vector<8x1xf32>
    %133 = arith.addf %129, %132 : vector<8x1xf32>
    %134 = math.rsqrt %133 : vector<8x1xf32>
    %135 = vector.broadcast %134 : vector<8x1xf32> to vector<8x32xf32>
    %136 = arith.mulf %131, %135 : vector<8x32xf32>
    %137 = vector.broadcast %116 : vector<1x32xf32> to vector<8x32xf32>
    %138 = arith.mulf %136, %137 : vector<8x32xf32>
    %139 = vector.broadcast %117 : vector<1x32xf32> to vector<8x32xf32>
    %140 = arith.addf %138, %139 : vector<8x32xf32>
    %c0_62 = arith.constant 0 : index
    %c0_63 = arith.constant 0 : index
    %c0_64 = arith.constant 0 : index
    %141 = vector.load %arg15[%c0_62, %c0_63, %c0_64] : memref<1x8x32xf32, #tpu.memory_space<vmem>>, vector<1x8x32xf32>
    %142 = vector.shape_cast %141 : vector<1x8x32xf32> to vector<8x32xf32>
    %143 = vector.shape_cast %140 : vector<8x32xf32> to vector<1x8x32xf32>
    tpu.vector_store %arg15[%c0_62, %c0_63, %c0_64], %143 {strides = array<i32>} : memref<1x8x32xf32, #tpu.memory_space<vmem>>, vector<1x8x32xf32>,
    return
  }
  func.func @transform_0(%arg0: i32) -> (i32, i32, i32) {
    %c0_i32 = arith.constant 0 : i32
    %c0_i32_0 = arith.constant 0 : i32
    %c0_i32_1 = arith.constant 0 : i32
    return %arg0, %c0_i32, %c0_i32_0 : i32, i32, i32
  }
  func.func @transform_1(%arg0: i32) -> (i32, i32, i32) {
    %c0_i32 = arith.constant 0 : i32
    %c0_i32_0 = arith.constant 0 : i32
    %c0_i32_1 = arith.constant 0 : i32
    return %arg0, %c0_i32, %c0_i32_0 : i32, i32, i32
  }
  func.func @transform_2(%arg0: i32) -> (i32, i32, i32) {
    %c0_i32 = arith.constant 0 : i32
    %c0_i32_0 = arith.constant 0 : i32
    %c0_i32_1 = arith.constant 0 : i32
    return %arg0, %c0_i32, %c0_i32_0 : i32, i32, i32
  }
  func.func @transform_3(%arg0: i32) -> (i32, i32) {
    %c0_i32 = arith.constant 0 : i32
    %c0_i32_0 = arith.constant 0 : i32
    %c0_i32_1 = arith.constant 0 : i32
    return %c0_i32, %c0_i32_0 : i32, i32
  }
  func.func @transform_4(%arg0: i32) -> (i32, i32) {
    %c0_i32 = arith.constant 0 : i32
    %c0_i32_0 = arith.constant 0 : i32
    %c0_i32_1 = arith.constant 0 : i32
    return %c0_i32, %c0_i32_0 : i32, i32
  }
  func.func @transform_5(%arg0: i32) -> (i32, i32) {
    %c0_i32 = arith.constant 0 : i32
    %c0_i32_0 = arith.constant 0 : i32
    %c0_i32_1 = arith.constant 0 : i32
    return %c0_i32, %c0_i32_0 : i32, i32
  }
  func.func @transform_6(%arg0: i32) -> (i32, i32) {
    %c0_i32 = arith.constant 0 : i32
    %c0_i32_0 = arith.constant 0 : i32
    %c0_i32_1 = arith.constant 0 : i32
    return %c0_i32, %c0_i32_0 : i32, i32
  }
  func.func @transform_7(%arg0: i32) -> (i32, i32) {
    %c0_i32 = arith.constant 0 : i32
    %c0_i32_0 = arith.constant 0 : i32
    %c0_i32_1 = arith.constant 0 : i32
    return %c0_i32, %c0_i32_0 : i32, i32
  }
  func.func @transform_8(%arg0: i32) -> (i32, i32) {
    %c0_i32 = arith.constant 0 : i32
    %c0_i32_0 = arith.constant 0 : i32
    %c0_i32_1 = arith.constant 0 : i32
    return %c0_i32, %c0_i32_0 : i32, i32
  }
  func.func @transform_9(%arg0: i32) -> (i32, i32) {
    %c0_i32 = arith.constant 0 : i32
    %c0_i32_0 = arith.constant 0 : i32
    %c0_i32_1 = arith.constant 0 : i32
    return %c0_i32, %c0_i32_0 : i32, i32
  }
  func.func @transform_10(%arg0: i32) -> (i32, i32) {
    %c0_i32 = arith.constant 0 : i32
    %c0_i32_0 = arith.constant 0 : i32
    %c0_i32_1 = arith.constant 0 : i32
    return %c0_i32, %c0_i32_0 : i32, i32
  }
  func.func @transform_11(%arg0: i32) -> (i32, i32) {
    %c0_i32 = arith.constant 0 : i32
    %c0_i32_0 = arith.constant 0 : i32
    %c0_i32_1 = arith.constant 0 : i32
    return %c0_i32, %c0_i32_0 : i32, i32
  }
  func.func @transform_12(%arg0: i32) -> (i32, i32) {
    %c0_i32 = arith.constant 0 : i32
    %c0_i32_0 = arith.constant 0 : i32
    %c0_i32_1 = arith.constant 0 : i32
    return %c0_i32, %c0_i32_0 : i32, i32
  }
  func.func @transform_13(%arg0: i32) -> (i32, i32) {
    %c0_i32 = arith.constant 0 : i32
    %c0_i32_0 = arith.constant 0 : i32
    %c0_i32_1 = arith.constant 0 : i32
    return %c0_i32, %c0_i32_0 : i32, i32
  }
  func.func @transform_14(%arg0: i32) -> (i32, i32, i32) {
    %c0_i32 = arith.constant 0 : i32
    %c0_i32_0 = arith.constant 0 : i32
    %c0_i32_1 = arith.constant 0 : i32
    return %arg0, %c0_i32, %c0_i32_0 : i32, i32, i32
  }
}

module attributes {stable_mosaic.version = 11 : i64} {
  func.func @_linear_bias_kernel(%arg0: memref<16x32xf32, #tpu.memory_space<vmem>>, %arg1: memref<32x128xf32, #tpu.memory_space<vmem>>, %arg2: memref<1x128xf32, #tpu.memory_space<vmem>>, %arg3: memref<16x128xf32, #tpu.memory_space<vmem>>) attributes {dimension_semantics = [], scalar_prefetch = 0 : i64, scratch_operands = 0 : i64, tpu.core_type = #tpu.core_type<tc>} {
    %c0 = arith.constant 0 : index
    %c0_0 = arith.constant 0 : index
    %0 = vector.load %arg0[%c0, %c0_0] : memref<16x32xf32, #tpu.memory_space<vmem>>, vector<16x32xf32>
    %c0_1 = arith.constant 0 : index
    %c0_2 = arith.constant 0 : index
    %1 = vector.load %arg1[%c0_1, %c0_2] : memref<32x128xf32, #tpu.memory_space<vmem>>, vector<32x128xf32>
    %cst = arith.constant dense<0.000000e+00> : vector<16x128xf32>
    %2 = tpu.matmul %0, %1, %cst {dimension_numbers = #tpu.dot_dimension_numbers<[1], [0], [0], [1], [0, 0, 1, 1], [], []>} : vector<16x32xf32>, vector<32x128xf32>, vector<16x128xf32> -> vector<16x128xf32>
    %c0_3 = arith.constant 0 : index
    %c0_4 = arith.constant 0 : index
    %3 = vector.load %arg2[%c0_3, %c0_4] : memref<1x128xf32, #tpu.memory_space<vmem>>, vector<1x128xf32>
    %4 = vector.broadcast %3 : vector<1x128xf32> to vector<16x128xf32>
    %5 = arith.addf %2, %4 : vector<16x128xf32>
    %c0_5 = arith.constant 0 : index
    %c0_6 = arith.constant 0 : index
    %6 = vector.load %arg3[%c0_5, %c0_6] : memref<16x128xf32, #tpu.memory_space<vmem>>, vector<16x128xf32>
    tpu.vector_store %arg3[%c0_5, %c0_6], %5 {strides = array<i32>} : memref<16x128xf32, #tpu.memory_space<vmem>>, vector<16x128xf32>,
    return
  }
}

module attributes {stable_mosaic.version = 11 : i64} {
  func.func @_self_attn_norm_kernel(%arg0: i32, %arg1: memref<1x8x32xf32, #tpu.memory_space<vmem>>, %arg2: memref<1x8x8xf32, #tpu.memory_space<vmem>>, %arg3: memref<32x32xf32, #tpu.memory_space<vmem>>, %arg4: memref<32x64xf32, #tpu.memory_space<vmem>>, %arg5: memref<32x32xf32, #tpu.memory_space<vmem>>, %arg6: memref<1x32xf32, #tpu.memory_space<vmem>>, %arg7: memref<1x32xf32, #tpu.memory_space<vmem>>, %arg8: memref<1x8x32xf32, #tpu.memory_space<vmem>>) attributes {dimension_semantics = [#tpu.dimension_semantics<parallel>], iteration_bounds = array<i64: 2>, scalar_prefetch = 0 : i64, scratch_operands = 0 : i64, tpu.core_type = #tpu.core_type<tc>, window_params = [{transform_indices = @transform_0, window_bounds = array<i64: 1, 8, 32>}, {transform_indices = @transform_1, window_bounds = array<i64: 1, 8, 8>}, {pipeline_mode = #tpu.pipeline_mode<synchronous>, transform_indices = @transform_2, window_bounds = array<i64: 32, 32>}, {pipeline_mode = #tpu.pipeline_mode<synchronous>, transform_indices = @transform_3, window_bounds = array<i64: 32, 64>}, {pipeline_mode = #tpu.pipeline_mode<synchronous>, transform_indices = @transform_4, window_bounds = array<i64: 32, 32>}, {pipeline_mode = #tpu.pipeline_mode<synchronous>, transform_indices = @transform_5, window_bounds = array<i64: 1, 32>}, {pipeline_mode = #tpu.pipeline_mode<synchronous>, transform_indices = @transform_6, window_bounds = array<i64: 1, 32>}, {transform_indices = @transform_7, window_bounds = array<i64: 1, 8, 32>}]} {
    %c0 = arith.constant 0 : index
    %c0_0 = arith.constant 0 : index
    %c0_1 = arith.constant 0 : index
    %0 = vector.load %arg1[%c0, %c0_0, %c0_1] : memref<1x8x32xf32, #tpu.memory_space<vmem>>, vector<1x8x32xf32>
    %1 = vector.shape_cast %0 : vector<1x8x32xf32> to vector<8x32xf32>
    %c0_2 = arith.constant 0 : index
    %c0_3 = arith.constant 0 : index
    %c0_4 = arith.constant 0 : index
    %2 = vector.load %arg2[%c0_2, %c0_3, %c0_4] : memref<1x8x8xf32, #tpu.memory_space<vmem>>, vector<1x8x8xf32>
    %3 = vector.shape_cast %2 : vector<1x8x8xf32> to vector<8x8xf32>
    %c0_5 = arith.constant 0 : index
    %c0_6 = arith.constant 0 : index
    %4 = vector.load %arg3[%c0_5, %c0_6] : memref<32x32xf32, #tpu.memory_space<vmem>>, vector<32x32xf32>
    %c0_7 = arith.constant 0 : index
    %c0_8 = arith.constant 0 : index
    %5 = vector.load %arg4[%c0_7, %c0_8] : memref<32x64xf32, #tpu.memory_space<vmem>>, vector<32x64xf32>
    %c0_9 = arith.constant 0 : index
    %c0_10 = arith.constant 0 : index
    %6 = vector.load %arg5[%c0_9, %c0_10] : memref<32x32xf32, #tpu.memory_space<vmem>>, vector<32x32xf32>
    %cst = arith.constant dense<0.000000e+00> : vector<8x32xf32>
    %7 = tpu.matmul %1, %4, %cst {dimension_numbers = #tpu.dot_dimension_numbers<[1], [0], [0], [1], [0, 0, 1, 1], [], []>} : vector<8x32xf32>, vector<32x32xf32>, vector<8x32xf32> -> vector<8x32xf32>
    %cst_11 = arith.constant 0.176776692 : f32
    %8 = vector.broadcast %cst_11 : f32 to vector<8x32xf32>
    %9 = arith.mulf %7, %8 : vector<8x32xf32>
    %cst_12 = arith.constant dense<0.000000e+00> : vector<8x64xf32>
    %10 = tpu.matmul %1, %5, %cst_12 {dimension_numbers = #tpu.dot_dimension_numbers<[1], [0], [0], [1], [0, 0, 1, 1], [], []>} : vector<8x32xf32>, vector<32x64xf32>, vector<8x64xf32> -> vector<8x64xf32>
    %11 = vector.extract_strided_slice %9 {offsets = [0, 0], sizes = [8, 8], strides = [1, 1]} : vector<8x32xf32> to vector<8x8xf32>
    %12 = vector.extract_strided_slice %10 {offsets = [0, 0], sizes = [8, 8], strides = [1, 1]} : vector<8x64xf32> to vector<8x8xf32>
    %13 = vector.extract_strided_slice %10 {offsets = [0, 32], sizes = [8, 8], strides = [1, 1]} : vector<8x64xf32> to vector<8x8xf32>
    %cst_13 = arith.constant dense<0.000000e+00> : vector<8x8xf32>
    %14 = tpu.matmul %11, %12, %cst_13 {dimension_numbers = #tpu.dot_dimension_numbers<[1], [1], [0], [0], [0, 0, 1, 0], [], []>} : vector<8x8xf32>, vector<8x8xf32>, vector<8x8xf32> -> vector<8x8xf32>
    %15 = arith.addf %14, %3 : vector<8x8xf32>
    %cst_14 = arith.constant dense<0xFF800000> : vector<8xf32>
    %16 = vector.multi_reduction <maximumf>, %15, %cst_14 [1] : vector<8x8xf32> to vector<8xf32>
    %17 = vector.shape_cast %16 : vector<8xf32> to vector<8x1xf32>
    %18 = vector.broadcast %17 : vector<8x1xf32> to vector<8x8xf32>
    %19 = arith.subf %15, %18 : vector<8x8xf32>
    %20 = math.exp %19 : vector<8x8xf32>
    %cst_15 = arith.constant dense<0.000000e+00> : vector<8xf32>
    %21 = vector.multi_reduction <add>, %20, %cst_15 [1] : vector<8x8xf32> to vector<8xf32>
    %22 = vector.shape_cast %21 : vector<8xf32> to vector<8x1xf32>
    %23 = tpu.reciprocal %22 {approx = true} : vector<8x1xf32> -> vector<8x1xf32>
    %24 = vector.broadcast %23 : vector<8x1xf32> to vector<8x8xf32>
    %25 = arith.mulf %20, %24 : vector<8x8xf32>
    %cst_16 = arith.constant dense<0.000000e+00> : vector<8x8xf32>
    %26 = tpu.matmul %25, %13, %cst_16 {dimension_numbers = #tpu.dot_dimension_numbers<[1], [0], [0], [1], [0, 0, 1, 1], [], []>} : vector<8x8xf32>, vector<8x8xf32>, vector<8x8xf32> -> vector<8x8xf32>
    %27 = vector.extract_strided_slice %9 {offsets = [0, 8], sizes = [8, 8], strides = [1, 1]} : vector<8x32xf32> to vector<8x8xf32>
    %28 = vector.extract_strided_slice %10 {offsets = [0, 8], sizes = [8, 8], strides = [1, 1]} : vector<8x64xf32> to vector<8x8xf32>
    %29 = vector.extract_strided_slice %10 {offsets = [0, 40], sizes = [8, 8], strides = [1, 1]} : vector<8x64xf32> to vector<8x8xf32>
    %cst_17 = arith.constant dense<0.000000e+00> : vector<8x8xf32>
    %30 = tpu.matmul %27, %28, %cst_17 {dimension_numbers = #tpu.dot_dimension_numbers<[1], [1], [0], [0], [0, 0, 1, 0], [], []>} : vector<8x8xf32>, vector<8x8xf32>, vector<8x8xf32> -> vector<8x8xf32>
    %31 = arith.addf %30, %3 : vector<8x8xf32>
    %cst_18 = arith.constant dense<0xFF800000> : vector<8xf32>
    %32 = vector.multi_reduction <maximumf>, %31, %cst_18 [1] : vector<8x8xf32> to vector<8xf32>
    %33 = vector.shape_cast %32 : vector<8xf32> to vector<8x1xf32>
    %34 = vector.broadcast %33 : vector<8x1xf32> to vector<8x8xf32>
    %35 = arith.subf %31, %34 : vector<8x8xf32>
    %36 = math.exp %35 : vector<8x8xf32>
    %cst_19 = arith.constant dense<0.000000e+00> : vector<8xf32>
    %37 = vector.multi_reduction <add>, %36, %cst_19 [1] : vector<8x8xf32> to vector<8xf32>
    %38 = vector.shape_cast %37 : vector<8xf32> to vector<8x1xf32>
    %39 = tpu.reciprocal %38 {approx = true} : vector<8x1xf32> -> vector<8x1xf32>
    %40 = vector.broadcast %39 : vector<8x1xf32> to vector<8x8xf32>
    %41 = arith.mulf %36, %40 : vector<8x8xf32>
    %cst_20 = arith.constant dense<0.000000e+00> : vector<8x8xf32>
    %42 = tpu.matmul %41, %29, %cst_20 {dimension_numbers = #tpu.dot_dimension_numbers<[1], [0], [0], [1], [0, 0, 1, 1], [], []>} : vector<8x8xf32>, vector<8x8xf32>, vector<8x8xf32> -> vector<8x8xf32>
    %43 = vector.extract_strided_slice %9 {offsets = [0, 16], sizes = [8, 8], strides = [1, 1]} : vector<8x32xf32> to vector<8x8xf32>
    %44 = vector.extract_strided_slice %10 {offsets = [0, 16], sizes = [8, 8], strides = [1, 1]} : vector<8x64xf32> to vector<8x8xf32>
    %45 = vector.extract_strided_slice %10 {offsets = [0, 48], sizes = [8, 8], strides = [1, 1]} : vector<8x64xf32> to vector<8x8xf32>
    %cst_21 = arith.constant dense<0.000000e+00> : vector<8x8xf32>
    %46 = tpu.matmul %43, %44, %cst_21 {dimension_numbers = #tpu.dot_dimension_numbers<[1], [1], [0], [0], [0, 0, 1, 0], [], []>} : vector<8x8xf32>, vector<8x8xf32>, vector<8x8xf32> -> vector<8x8xf32>
    %47 = arith.addf %46, %3 : vector<8x8xf32>
    %cst_22 = arith.constant dense<0xFF800000> : vector<8xf32>
    %48 = vector.multi_reduction <maximumf>, %47, %cst_22 [1] : vector<8x8xf32> to vector<8xf32>
    %49 = vector.shape_cast %48 : vector<8xf32> to vector<8x1xf32>
    %50 = vector.broadcast %49 : vector<8x1xf32> to vector<8x8xf32>
    %51 = arith.subf %47, %50 : vector<8x8xf32>
    %52 = math.exp %51 : vector<8x8xf32>
    %cst_23 = arith.constant dense<0.000000e+00> : vector<8xf32>
    %53 = vector.multi_reduction <add>, %52, %cst_23 [1] : vector<8x8xf32> to vector<8xf32>
    %54 = vector.shape_cast %53 : vector<8xf32> to vector<8x1xf32>
    %55 = tpu.reciprocal %54 {approx = true} : vector<8x1xf32> -> vector<8x1xf32>
    %56 = vector.broadcast %55 : vector<8x1xf32> to vector<8x8xf32>
    %57 = arith.mulf %52, %56 : vector<8x8xf32>
    %cst_24 = arith.constant dense<0.000000e+00> : vector<8x8xf32>
    %58 = tpu.matmul %57, %45, %cst_24 {dimension_numbers = #tpu.dot_dimension_numbers<[1], [0], [0], [1], [0, 0, 1, 1], [], []>} : vector<8x8xf32>, vector<8x8xf32>, vector<8x8xf32> -> vector<8x8xf32>
    %59 = vector.extract_strided_slice %9 {offsets = [0, 24], sizes = [8, 8], strides = [1, 1]} : vector<8x32xf32> to vector<8x8xf32>
    %60 = vector.extract_strided_slice %10 {offsets = [0, 24], sizes = [8, 8], strides = [1, 1]} : vector<8x64xf32> to vector<8x8xf32>
    %61 = vector.extract_strided_slice %10 {offsets = [0, 56], sizes = [8, 8], strides = [1, 1]} : vector<8x64xf32> to vector<8x8xf32>
    %cst_25 = arith.constant dense<0.000000e+00> : vector<8x8xf32>
    %62 = tpu.matmul %59, %60, %cst_25 {dimension_numbers = #tpu.dot_dimension_numbers<[1], [1], [0], [0], [0, 0, 1, 0], [], []>} : vector<8x8xf32>, vector<8x8xf32>, vector<8x8xf32> -> vector<8x8xf32>
    %63 = arith.addf %62, %3 : vector<8x8xf32>
    %cst_26 = arith.constant dense<0xFF800000> : vector<8xf32>
    %64 = vector.multi_reduction <maximumf>, %63, %cst_26 [1] : vector<8x8xf32> to vector<8xf32>
    %65 = vector.shape_cast %64 : vector<8xf32> to vector<8x1xf32>
    %66 = vector.broadcast %65 : vector<8x1xf32> to vector<8x8xf32>
    %67 = arith.subf %63, %66 : vector<8x8xf32>
    %68 = math.exp %67 : vector<8x8xf32>
    %cst_27 = arith.constant dense<0.000000e+00> : vector<8xf32>
    %69 = vector.multi_reduction <add>, %68, %cst_27 [1] : vector<8x8xf32> to vector<8xf32>
    %70 = vector.shape_cast %69 : vector<8xf32> to vector<8x1xf32>
    %71 = tpu.reciprocal %70 {approx = true} : vector<8x1xf32> -> vector<8x1xf32>
    %72 = vector.broadcast %71 : vector<8x1xf32> to vector<8x8xf32>
    %73 = arith.mulf %68, %72 : vector<8x8xf32>
    %cst_28 = arith.constant dense<0.000000e+00> : vector<8x8xf32>
    %74 = tpu.matmul %73, %61, %cst_28 {dimension_numbers = #tpu.dot_dimension_numbers<[1], [0], [0], [1], [0, 0, 1, 1], [], []>} : vector<8x8xf32>, vector<8x8xf32>, vector<8x8xf32> -> vector<8x8xf32>
    %75 = tpu.concatenate %26, %42, %58, %74 in 1 : vector<8x8xf32>, vector<8x8xf32>, vector<8x8xf32>, vector<8x8xf32> -> vector<8x32xf32>
    %cst_29 = arith.constant dense<0.000000e+00> : vector<8x32xf32>
    %76 = tpu.matmul %75, %6, %cst_29 {dimension_numbers = #tpu.dot_dimension_numbers<[1], [0], [0], [1], [0, 0, 1, 1], [], []>} : vector<8x32xf32>, vector<32x32xf32>, vector<8x32xf32> -> vector<8x32xf32>
    %c0_30 = arith.constant 0 : index
    %c0_31 = arith.constant 0 : index
    %77 = vector.load %arg6[%c0_30, %c0_31] : memref<1x32xf32, #tpu.memory_space<vmem>>, vector<1x32xf32>
    %c0_32 = arith.constant 0 : index
    %c0_33 = arith.constant 0 : index
    %78 = vector.load %arg7[%c0_32, %c0_33] : memref<1x32xf32, #tpu.memory_space<vmem>>, vector<1x32xf32>
    %79 = arith.addf %76, %1 : vector<8x32xf32>
    %cst_34 = arith.constant dense<0.000000e+00> : vector<8xf32>
    %80 = vector.multi_reduction <add>, %79, %cst_34 [1] : vector<8x32xf32> to vector<8xf32>
    %81 = vector.shape_cast %80 : vector<8xf32> to vector<8x1xf32>
    %cst_35 = arith.constant 3.200000e+01 : f32
    %82 = vector.broadcast %cst_35 : f32 to vector<8x1xf32>
    %83 = arith.divf %81, %82 : vector<8x1xf32>
    %84 = vector.broadcast %83 : vector<8x1xf32> to vector<8x32xf32>
    %85 = arith.subf %79, %84 : vector<8x32xf32>
    %86 = arith.mulf %85, %85 : vector<8x32xf32>
    %cst_36 = arith.constant dense<0.000000e+00> : vector<8xf32>
    %87 = vector.multi_reduction <add>, %86, %cst_36 [1] : vector<8x32xf32> to vector<8xf32>
    %88 = vector.shape_cast %87 : vector<8xf32> to vector<8x1xf32>
    %cst_37 = arith.constant 3.200000e+01 : f32
    %89 = vector.broadcast %cst_37 : f32 to vector<8x1xf32>
    %90 = arith.divf %88, %89 : vector<8x1xf32>
    %91 = vector.broadcast %83 : vector<8x1xf32> to vector<8x32xf32>
    %92 = arith.subf %79, %91 : vector<8x32xf32>
    %cst_38 = arith.constant 9.99999974E-6 : f32
    %93 = vector.broadcast %cst_38 : f32 to vector<8x1xf32>
    %94 = arith.addf %90, %93 : vector<8x1xf32>
    %95 = math.rsqrt %94 : vector<8x1xf32>
    %96 = vector.broadcast %95 : vector<8x1xf32> to vector<8x32xf32>
    %97 = arith.mulf %92, %96 : vector<8x32xf32>
    %98 = vector.broadcast %77 : vector<1x32xf32> to vector<8x32xf32>
    %99 = arith.mulf %97, %98 : vector<8x32xf32>
    %100 = vector.broadcast %78 : vector<1x32xf32> to vector<8x32xf32>
    %101 = arith.addf %99, %100 : vector<8x32xf32>
    %c0_39 = arith.constant 0 : index
    %c0_40 = arith.constant 0 : index
    %c0_41 = arith.constant 0 : index
    %102 = vector.load %arg8[%c0_39, %c0_40, %c0_41] : memref<1x8x32xf32, #tpu.memory_space<vmem>>, vector<1x8x32xf32>
    %103 = vector.shape_cast %102 : vector<1x8x32xf32> to vector<8x32xf32>
    %104 = vector.shape_cast %101 : vector<8x32xf32> to vector<1x8x32xf32>
    tpu.vector_store %arg8[%c0_39, %c0_40, %c0_41], %104 {strides = array<i32>} : memref<1x8x32xf32, #tpu.memory_space<vmem>>, vector<1x8x32xf32>,
    return
  }
  func.func @transform_0(%arg0: i32) -> (i32, i32, i32) {
    %c0_i32 = arith.constant 0 : i32
    %c0_i32_0 = arith.constant 0 : i32
    %c0_i32_1 = arith.constant 0 : i32
    return %arg0, %c0_i32, %c0_i32_0 : i32, i32, i32
  }
  func.func @transform_1(%arg0: i32) -> (i32, i32, i32) {
    %c0_i32 = arith.constant 0 : i32
    %c0_i32_0 = arith.constant 0 : i32
    %c0_i32_1 = arith.constant 0 : i32
    return %arg0, %c0_i32, %c0_i32_0 : i32, i32, i32
  }
  func.func @transform_2(%arg0: i32) -> (i32, i32) {
    %c0_i32 = arith.constant 0 : i32
    %c0_i32_0 = arith.constant 0 : i32
    %c0_i32_1 = arith.constant 0 : i32
    return %c0_i32, %c0_i32_0 : i32, i32
  }
  func.func @transform_3(%arg0: i32) -> (i32, i32) {
    %c0_i32 = arith.constant 0 : i32
    %c0_i32_0 = arith.constant 0 : i32
    %c0_i32_1 = arith.constant 0 : i32
    return %c0_i32, %c0_i32_0 : i32, i32
  }
  func.func @transform_4(%arg0: i32) -> (i32, i32) {
    %c0_i32 = arith.constant 0 : i32
    %c0_i32_0 = arith.constant 0 : i32
    %c0_i32_1 = arith.constant 0 : i32
    return %c0_i32, %c0_i32_0 : i32, i32
  }
  func.func @transform_5(%arg0: i32) -> (i32, i32) {
    %c0_i32 = arith.constant 0 : i32
    %c0_i32_0 = arith.constant 0 : i32
    %c0_i32_1 = arith.constant 0 : i32
    return %c0_i32, %c0_i32_0 : i32, i32
  }
  func.func @transform_6(%arg0: i32) -> (i32, i32) {
    %c0_i32 = arith.constant 0 : i32
    %c0_i32_0 = arith.constant 0 : i32
    %c0_i32_1 = arith.constant 0 : i32
    return %c0_i32, %c0_i32_0 : i32, i32
  }
  func.func @transform_7(%arg0: i32) -> (i32, i32, i32) {
    %c0_i32 = arith.constant 0 : i32
    %c0_i32_0 = arith.constant 0 : i32
    %c0_i32_1 = arith.constant 0 : i32
    return %arg0, %c0_i32, %c0_i32_0 : i32, i32, i32
  }
}

</mosaic_0001>

<llo_original>
// kernel: _lambda_.13
$region0: #{_lambda_.13}
  #allocation0 [shape = 'u32[]', space=smem, size = 0x4, offset = 0x4, fixed_abs, tag = 'smem constant byte address 0x4 - core index']
  #allocation1 [shape = 'u32[72,128]{1,0:T(1,128)}', space=vmem, size = 0x9000, scoped, tag = 'internal scratch']
  %s0 = inlined_call_operand.vmem [shape: f32[16,32], index: 0, kind: input, shape index: {}]
  %s1 = inlined_call_operand.vmem [shape: f32[32,128], index: 1, kind: input, shape index: {}]
  %s2 = inlined_call_operand.vmem [shape: f32[1,128], index: 2, kind: input, shape index: {}]
  %s3 = inlined_call_operand.vmem [shape: f32[16,128], index: 3, kind: output, shape index: {}]
  %s4 = sld [smem:[#allocation0]]
  $region22: #{_lambda_.13} parent=0
    _
  %s6 = ssub.s32 1, %s4
  %s7 = scalar_select 0, %s6, %s4
  // Predicated region
  $region2: #{_lambda_.13} parent=0 // pred_check
    _
  $region3: #{_lambda_.13} parent=0 // pred_check_branch
    %9 = sbr.rel (0) target = $region5
  $region4: #{_lambda_.13} parent=0 // pred_region
    _
  $region5: #{_lambda_.13} parent=0 // pred_fallthru
    _
  // Predicated region
  $region6: #{_lambda_.13} parent=0 // pred_check
    _
  $region7: #{_lambda_.13} parent=0 // pred_check_branch
    %11 = sbr.rel (0) target = $region9
  $region8: #{_lambda_.13} parent=0 // pred_region
    _
  $region9: #{_lambda_.13} parent=0 // pred_fallthru
    _
  // Predicated region
  $region10: #{_lambda_.13} parent=0 // pred_check
    _
  $region11: #{_lambda_.13} parent=0 // pred_check_branch
    %13 = sbr.rel (0) target = $region13
  $region12: #{_lambda_.13} parent=0 // pred_region
    _
  $region13: #{_lambda_.13} parent=0 // pred_fallthru
    _
  %v14 = vld [vmem:[%s0] sm:$0xff]
  %v15 = vld [vmem:[%s0 + $0x8] sm:$0xff]
  %v16 = vld [vmem:[%s1] sm:$0xff]
  %v17 = vld [vmem:[%s1 + $0x8] sm:$0xff]
  %v18 = vld [vmem:[%s1 + $0x10] sm:$0xff]
  %v19 = vld [vmem:[%s1 + $0x18] sm:$0xff]
  %v20 = vld [vmem:[%s2] sm:$0x1]
  %v22 = vperm.slane %v20, 0
  %vm24 = vcmask 261120
  %v26 = vsel %vm24, %v14, 0
  %v29 = vsel %vm24, %v15, 0
  %31 = vmatpush.msra.mxu0 0.0
  %32 = vmatpush.msra.mxu0 0.0
  %33 = vmatpush.msra.mxu0 0.0
  %34 = vmatpush.msra.mxu0 0.0
  %35 = vmatpush.msra.mxu0 0.0
  %36 = vmatpush.msra.mxu0 0.0
  %37 = vmatpush.msra.mxu0 0.0
  %38 = vmatpush.msra.mxu0 0.0
  %39 = vmatpush.msra.mxu0 0.0
  %40 = vmatpush.msra.mxu0 0.0
  %41 = vmatpush.msra.mxu0 0.0
  %42 = vmatpush.msra.mxu0 0.0
  %43 = vmatpush.msra.mxu0 %v19
  %44 = vmatpush.msra.mxu0 %v18
  %45 = vmatpush.msra.mxu0 %v17
  %46 = vmatpush.msra.mxu0 %v16
  %47 = vmatmul.f32.gmra.mxu0 %v26
  %v48 = vpop.f32.mrf.mxu0
  %v49 = vadd.f32 %v22, %v48
  %50 = vmatmul.f32.gmra.mxu0 %v29
  %v51 = vpop.f32.mrf.mxu0
  %v52 = vadd.f32 %v22, %v51
  %53 = vdwg.mxu0
  %54 = vst [vmem:[%s3] sm:$0xff] %v49
  %55 = vst [vmem:[%s3 + $0x8] sm:$0xff] %v52
  // Predicated region
  $region14: #{_lambda_.13} parent=0 // pred_check
    _
  $region15: #{_lambda_.13} parent=0 // pred_check_branch
    %57 = sbr.rel (0) target = $region17
  $region16: #{_lambda_.13} parent=0 // pred_region
    _
  $region17: #{_lambda_.13} parent=0 // pred_fallthru
    _
  // Predicated region
  $region18: #{_lambda_.13} parent=0 // pred_check
    _
  $region19: #{_lambda_.13} parent=0 // pred_check_branch
    %59 = sbr.rel (0) target = $region21
  $region20: #{_lambda_.13} parent=0 // pred_region
    _
  $region21: #{_lambda_.13} parent=0 // pred_fallthru
    _

// kernel: _lambda_.9
$region0: #{_lambda_.9}
  #allocation0 [shape = 'u32[]', space=smem, size = 0x4, offset = 0x4, fixed_abs, tag = 'smem constant byte address 0x4 - core index']
  #allocation1 [shape = 'u32[72,128]{1,0:T(1,128)}', space=vmem, size = 0x9000, scoped, tag = 'internal scratch']
  %s0 = inlined_call_operand.vmem [shape: f32[2,8,32], index: 0, kind: input, shape index: {}]
  %s1 = inlined_call_operand.vmem [shape: f32[2,8,8], index: 1, kind: input, shape index: {}]
  %s2 = inlined_call_operand.vmem [shape: f32[32,32], index: 2, kind: input, shape index: {}]
  %s3 = inlined_call_operand.vmem [shape: f32[32,64], index: 3, kind: input, shape index: {}]
  %s4 = inlined_call_operand.vmem [shape: f32[32,32], index: 4, kind: input, shape index: {}]
  %s5 = inlined_call_operand.vmem [shape: f32[1,32], index: 5, kind: input, shape index: {}]
  %s6 = inlined_call_operand.vmem [shape: f32[1,32], index: 6, kind: input, shape index: {}]
  %s7 = inlined_call_operand.vmem [shape: f32[2,8,32], index: 7, kind: output, shape index: {}]
  %s8 = sld [smem:[#allocation0]]
  $region61: #{_lambda_.9} parent=0
    _
  %s10 = ssub.s32 1, %s8
  %s11 = scalar_select 0, %s10, %s8
  loop: start=0, step=1, limit=4
  $region2: #{_lambda_.9} parent=0 // loop_pre_header
    _
  $region3: #{_lambda_.9} parent=0 // loop_header
    %s13 = sphi 0, %s17
    %p14 = scmp.ge.s32.totalorder %s13, 4
    %s23 = sphi 0, %s25
    %s26 = sphi 0, %s23
    %s27 = sphi 0, %s26
    %s43 = sphi 0, %s27
    %s49 = sphi 0, %s51
    %s52 = sphi 0, %s49
    %s53 = sphi 0, %s52
    %s69 = sphi 0, %s53
    %s73 = sphi 0, %s73
    %s75 = sphi 0, %s73
    %s76 = sphi 0, %s75
    %s90 = sphi 0, %s76
    %s94 = sphi 0, %s94
    %s96 = sphi 0, %s94
    %s97 = sphi 0, %s96
    %s111 = sphi 0, %s97
    %s115 = sphi 0, %s115
    %s117 = sphi 0, %s115
    %s118 = sphi 0, %s117
    %s132 = sphi 0, %s118
    %s136 = sphi 0, %s136
    %s138 = sphi 0, %s136
    %s139 = sphi 0, %s138
    %s153 = sphi 0, %s139
    %s157 = sphi 0, %s157
    %s159 = sphi 0, %s157
    %s160 = sphi 0, %s159
    %s174 = sphi 0, %s160
    %s180 = sphi 0, %s182
    %s183 = sphi 0, %s180
    %s184 = sphi 0, %s183
    %s200 = sphi 0, %s184
  $region4: #{_lambda_.9} parent=0 // loop_header_branch
    %16 = sbr.rel (%p14) target = $region8
  $region5: #{_lambda_.9} parent=0 // loop_body
    %s18 = ssub.s32 %s13, 1
    %s19 = ssub.s32 %s13, 2
    %s20 = sadd.s32 %s13, 1
    %s21 = ssub.s32 %s13, %s20
    %p22 = scmp.eq.s32.totalorder %s21, 0
    %s24 = sadd.s32 %s23, 1
    %s25 = scalar_select %p22, %s23, %s24
    %p28 = pneg %p22
    %p29 = scmp.eq.s32.totalorder %s13, 1
    %p30 = por %p28, %p29
    %p31 = scmp.ne.s32.totalorder %s23, %s26
    %p32 = scmp.eq.s32.totalorder %s13, 0
    %p33 = por %p31, %p32
    %p34 = scmp.ne.s32.totalorder %s23, %s26
    %p35 = scmp.eq.s32.totalorder %s18, 1
    %p36 = por %p34, %p35
    %p37 = scmp.ne.s32.totalorder %s26, %s27
    %p38 = scmp.eq.s32.totalorder %s18, 0
    %p39 = por %p37, %p38
    %p40 = scmp.ne.s32.totalorder %s26, %s27
    %p41 = scmp.eq.s32.totalorder %s19, 1
    %p42 = por %p40, %p41
    %p44 = scmp.ne.s32.totalorder %s27, %s43
    %p45 = scmp.eq.s32.totalorder %s19, 0
    %p46 = por %p44, %p45
    %s47 = ssub.s32 %s13, %s20
    %p48 = scmp.eq.s32.totalorder %s47, 0
    %s50 = sadd.s32 %s49, 1
    %s51 = scalar_select %p48, %s49, %s50
    %p54 = pneg %p48
    %p55 = scmp.eq.s32.totalorder %s13, 1
    %p56 = por %p54, %p55
    %p57 = scmp.ne.s32.totalorder %s49, %s52
    %p58 = scmp.eq.s32.totalorder %s13, 0
    %p59 = por %p57, %p58
    %p60 = scmp.ne.s32.totalorder %s49, %s52
    %p61 = scmp.eq.s32.totalorder %s18, 1
    %p62 = por %p60, %p61
    %p63 = scmp.ne.s32.totalorder %s52, %s53
    %p64 = scmp.eq.s32.totalorder %s18, 0
    %p65 = por %p63, %p64
    %p66 = scmp.ne.s32.totalorder %s52, %s53
    %p67 = scmp.eq.s32.totalorder %s19, 1
    %p68 = por %p66, %p67
    %p70 = scmp.ne.s32.totalorder %s53, %s69
    %p71 = scmp.eq.s32.totalorder %s19, 0
    %p72 = por %p70, %p71
    %s74 = sadd.s32 %s73, 1
    %p77 = scmp.eq.s32.totalorder %s13, 1
    %p78 = scmp.ne.s32.totalorder %s73, %s75
    %p79 = scmp.eq.s32.totalorder %s13, 0
    %p80 = por %p78, %p79
    %p81 = scmp.ne.s32.totalorder %s73, %s75
    %p82 = scmp.eq.s32.totalorder %s18, 1
    %p83 = por %p81, %p82
    %p84 = scmp.ne.s32.totalorder %s75, %s76
    %p85 = scmp.eq.s32.totalorder %s18, 0
    %p86 = por %p84, %p85
    %p87 = scmp.ne.s32.totalorder %s75, %s76
    %p88 = scmp.eq.s32.totalorder %s19, 1
    %p89 = por %p87, %p88
    %p91 = scmp.ne.s32.totalorder %s76, %s90
    %p92 = scmp.eq.s32.totalorder %s19, 0
    %p93 = por %p91, %p92
    %s95 = sadd.s32 %s94, 1
    %p98 = scmp.eq.s32.totalorder %s13, 1
    %p99 = scmp.ne.s32.totalorder %s94, %s96
    %p100 = scmp.eq.s32.totalorder %s13, 0
    %p101 = por %p99, %p100
    %p102 = scmp.ne.s32.totalorder %s94, %s96
    %p103 = scmp.eq.s32.totalorder %s18, 1
    %p104 = por %p102, %p103
    %p105 = scmp.ne.s32.totalorder %s96, %s97
    %p106 = scmp.eq.s32.totalorder %s18, 0
    %p107 = por %p105, %p106
    %p108 = scmp.ne.s32.totalorder %s96, %s97
    %p109 = scmp.eq.s32.totalorder %s19, 1
    %p110 = por %p108, %p109
    %p112 = scmp.ne.s32.totalorder %s97, %s111
    %p113 = scmp.eq.s32.totalorder %s19, 0
    %p114 = por %p112, %p113
    %s116 = sadd.s32 %s115, 1
    %p119 = scmp.eq.s32.totalorder %s13, 1
    %p120 = scmp.ne.s32.totalorder %s115, %s117
    %p121 = scmp.eq.s32.totalorder %s13, 0
    %p122 = por %p120, %p121
    %p123 = scmp.ne.s32.totalorder %s115, %s117
    %p124 = scmp.eq.s32.totalorder %s18, 1
    %p125 = por %p123, %p124
    %p126 = scmp.ne.s32.totalorder %s117, %s118
    %p127 = scmp.eq.s32.totalorder %s18, 0
    %p128 = por %p126, %p127
    %p129 = scmp.ne.s32.totalorder %s117, %s118
    %p130 = scmp.eq.s32.totalorder %s19, 1
    %p131 = por %p129, %p130
    %p133 = scmp.ne.s32.totalorder %s118, %s132
    %p134 = scmp.eq.s32.totalorder %s19, 0
    %p135 = por %p133, %p134
    %s137 = sadd.s32 %s136, 1
    %p140 = scmp.eq.s32.totalorder %s13, 1
    %p141 = scmp.ne.s32.totalorder %s136, %s138
    %p142 = scmp.eq.s32.totalorder %s13, 0
    %p143 = por %p141, %p142
    %p144 = scmp.ne.s32.totalorder %s136, %s138
    %p145 = scmp.eq.s32.totalorder %s18, 1
    %p146 = por %p144, %p145
    %p147 = scmp.ne.s32.totalorder %s138, %s139
    %p148 = scmp.eq.s32.totalorder %s18, 0
    %p149 = por %p147, %p148
    %p150 = scmp.ne.s32.totalorder %s138, %s139
    %p151 = scmp.eq.s32.totalorder %s19, 1
    %p152 = por %p150, %p151
    %p154 = scmp.ne.s32.totalorder %s139, %s153
    %p155 = scmp.eq.s32.totalorder %s19, 0
    %p156 = por %p154, %p155
    %s158 = sadd.s32 %s157, 1
    %p161 = scmp.eq.s32.totalorder %s13, 1
    %p162 = scmp.ne.s32.totalorder %s157, %s159
    %p163 = scmp.eq.s32.totalorder %s13, 0
    %p164 = por %p162, %p163
    %p165 = scmp.ne.s32.totalorder %s157, %s159
    %p166 = scmp.eq.s32.totalorder %s18, 1
    %p167 = por %p165, %p166
    %p168 = scmp.ne.s32.totalorder %s159, %s160
    %p169 = scmp.eq.s32.totalorder %s18, 0
    %p170 = por %p168, %p169
    %p171 = scmp.ne.s32.totalorder %s159, %s160
    %p172 = scmp.eq.s32.totalorder %s19, 1
    %p173 = por %p171, %p172
    %p175 = scmp.ne.s32.totalorder %s160, %s174
    %p176 = scmp.eq.s32.totalorder %s19, 0
    %p177 = por %p175, %p176
    %s178 = ssub.s32 %s13, %s20
    %p179 = scmp.eq.s32.totalorder %s178, 0
    %s181 = sadd.s32 %s180, 1
    %s182 = scalar_select %p179, %s180, %s181
    %p185 = pneg %p179
    %p186 = scmp.eq.s32.totalorder %s13, 1
    %p187 = por %p185, %p186
    %p188 = scmp.ne.s32.totalorder %s180, %s183
    %p189 = scmp.eq.s32.totalorder %s13, 0
    %p190 = por %p188, %p189
    %p191 = scmp.ne.s32.totalorder %s180, %s183
    %p192 = scmp.eq.s32.totalorder %s18, 1
    %p193 = por %p191, %p192
    %p194 = scmp.ne.s32.totalorder %s183, %s184
    %p195 = scmp.eq.s32.totalorder %s18, 0
    %p196 = por %p194, %p195
    %p197 = scmp.ne.s32.totalorder %s183, %s184
    %p198 = scmp.eq.s32.totalorder %s19, 1
    %p199 = por %p197, %p198
    %p201 = scmp.ne.s32.totalorder %s184, %s200
    %p202 = scmp.eq.s32.totalorder %s19, 0
    %p203 = por %p201, %p202
    %p204 = scmp.le.s32.totalorder 1, %s13
    %p205 = scmp.lt.s32.totalorder %s13, 3
    %p206 = pnand %p204, %p205
    %p207 = pneg %p206
    // Predicated region
    $region9: #{_lambda_.9} parent=5 // pred_check
      _
    $region10: #{_lambda_.9} parent=5 // pred_check_branch
      %209 = sbr.rel (%p206) target = $region12
    $region11: #{_lambda_.9} parent=5 // pred_region
      %s210 = ssub.s32 %s13, 1
      // Predicated region
      $region13: #{_lambda_.9} parent=11 // pred_check
        %p211 = pneg %p86
      $region14: #{_lambda_.9} parent=11 // pred_check_branch
        %213 = sbr.rel (%p211) target = $region16
      $region15: #{_lambda_.9} parent=11 // pred_region
        _
      $region16: #{_lambda_.9} parent=11 // pred_fallthru
        _
      // Predicated region
      $region17: #{_lambda_.9} parent=11 // pred_check
        %p214 = pneg %p107
      $region18: #{_lambda_.9} parent=11 // pred_check_branch
        %216 = sbr.rel (%p214) target = $region20
      $region19: #{_lambda_.9} parent=11 // pred_region
        _
      $region20: #{_lambda_.9} parent=11 // pred_fallthru
        _
      // Predicated region
      $region21: #{_lambda_.9} parent=11 // pred_check
        %p217 = pneg %p128
      $region22: #{_lambda_.9} parent=11 // pred_check_branch
        %219 = sbr.rel (%p217) target = $region24
      $region23: #{_lambda_.9} parent=11 // pred_region
        _
      $region24: #{_lambda_.9} parent=11 // pred_fallthru
        _
      // Predicated region
      $region25: #{_lambda_.9} parent=11 // pred_check
        %p220 = pneg %p149
      $region26: #{_lambda_.9} parent=11 // pred_check_branch
        %222 = sbr.rel (%p220) target = $region28
      $region27: #{_lambda_.9} parent=11 // pred_region
        _
      $region28: #{_lambda_.9} parent=11 // pred_fallthru
        _
      // Predicated region
      $region29: #{_lambda_.9} parent=11 // pred_check
        %p223 = pneg %p170
      $region30: #{_lambda_.9} parent=11 // pred_check_branch
        %225 = sbr.rel (%p223) target = $region32
      $region31: #{_lambda_.9} parent=11 // pred_region
        _
      $region32: #{_lambda_.9} parent=11 // pred_fallthru
        _
    $region12: #{_lambda_.9} parent=5 // pred_fallthru
      _
    %p226 = scmp.lt.s32.totalorder %s13, 2
    // Predicated region
    $region33: #{_lambda_.9} parent=5 // pred_check
      %p227 = pneg %p226
    $region34: #{_lambda_.9} parent=5 // pred_check_branch
      %229 = sbr.rel (%p227) target = $region36
    $region35: #{_lambda_.9} parent=5 // pred_region
      // Predicated region
      $region37: #{_lambda_.9} parent=35 // pred_check
        %p230 = pneg %p33
      $region38: #{_lambda_.9} parent=35 // pred_check_branch
        %232 = sbr.rel (%p230) target = $region40
      $region39: #{_lambda_.9} parent=35 // pred_region
        %p233 = scmp.lt.s32.totalorder %s13, 1
        %s234 = scalar_select %p233, %s13, 1
        %s235 = smul.addr %s234, 8
        %s236 = scalar_lea.vmem %s0, %s235
      $region40: #{_lambda_.9} parent=35 // pred_fallthru
        _
      // Predicated region
      $region41: #{_lambda_.9} parent=35 // pred_check
        %p237 = pneg %p59
      $region42: #{_lambda_.9} parent=35 // pred_check_branch
        %239 = sbr.rel (%p237) target = $region44
      $region43: #{_lambda_.9} parent=35 // pred_region
        %p240 = scmp.lt.s32.totalorder %s13, 1
        %s241 = scalar_select %p240, %s13, 1
        %s242 = smul.addr %s241, 8
        %s243 = scalar_lea.vmem %s1, %s242
      $region44: #{_lambda_.9} parent=35 // pred_fallthru
        _
    $region36: #{_lambda_.9} parent=5 // pred_fallthru
      _
    %p244 = scmp.le.s32.totalorder 1, %s13
    %p245 = scmp.lt.s32.totalorder %s13, 3
    %p246 = pnand %p244, %p245
    %p247 = pneg %p246
    // Predicated region
    $region45: #{_lambda_.9} parent=5 // pred_check
      _
    $region46: #{_lambda_.9} parent=5 // pred_check_branch
      %249 = sbr.rel (%p246) target = $region48
    $region47: #{_lambda_.9} parent=5 // pred_region
      %s250 = ssub.s32 %s13, 1
      %p251 = scmp.lt.s32.totalorder %s18, 1
      %s252 = scalar_select %p251, %s18, 1
      %s253 = smul.addr %s252, 8
      %s254 = scalar_lea.vmem %s0, %s253
      %p255 = pneg %p39
      %p256 = pneg %p36
      %p257 = scmp.lt.s32.totalorder %s18, 1
      %s258 = scalar_select %p257, %s18, 1
      %s259 = smul.addr %s258, 8
      %s260 = scalar_lea.vmem %s1, %s259
      %p261 = pneg %p65
      %p262 = pneg %p62
      %p263 = pneg %p86
      %p264 = pneg %p83
      %p265 = pneg %p107
      %p266 = pneg %p104
      %p267 = pneg %p128
      %p268 = pneg %p125
      %p269 = pneg %p149
      %p270 = pneg %p146
      %p271 = pneg %p170
      %p272 = pneg %p167
      %p273 = pneg %p196
      %p274 = pneg %p193
      %p275 = scmp.lt.s32.totalorder %s18, 1
      %s276 = scalar_select %p275, %s18, 1
      %s277 = smul.addr %s276, 8
      %s278 = scalar_lea.vmem %s7, %s277
      %p279 = scmp.lt.s32.totalorder %s18, 1
      %s280 = scalar_select %p279, %s18, 1
      %s281 = smul.addr %s280, 8
      %s282 = scalar_lea.vmem %s0, %s281
      %p283 = scmp.lt.s32.totalorder %s18, 1
      %s284 = scalar_select %p283, %s18, 1
      %s285 = smul.addr %s284, 8
      %s286 = scalar_lea.vmem %s1, %s285
      %p287 = scmp.lt.s32.totalorder %s18, 1
      %s288 = scalar_select %p287, %s18, 1
      %s289 = smul.addr %s288, 8
      %s290 = scalar_lea.vmem %s7, %s289
      %v291 = vld [vmem:[%s282] sm:$0xff]
      %v292 = vld [vmem:[%s286] sm:$0xff]
      %v293 = vld [vmem:[%s2] sm:$0xff]
      %v294 = vld [vmem:[%s2 + $0x8] sm:$0xff]
      %v295 = vld [vmem:[%s2 + $0x10] sm:$0xff]
      %v296 = vld [vmem:[%s2 + $0x18] sm:$0xff]
      %v297 = vld [vmem:[%s3] sm:$0xff]
      %v298 = vld [vmem:[%s3 + $0x8] sm:$0xff]
      %v299 = vld [vmem:[%s3 + $0x10] sm:$0xff]
      %v300 = vld [vmem:[%s3 + $0x18] sm:$0xff]
      %v301 = vld [vmem:[%s4] sm:$0xff]
      %v302 = vld [vmem:[%s4 + $0x8] sm:$0xff]
      %v303 = vld [vmem:[%s4 + $0x10] sm:$0xff]
      %v304 = vld [vmem:[%s4 + $0x18] sm:$0xff]
      %vm305 = vcmask 261120
      %v307 = vsel %vm305, %v291, 0
      %309 = vmatpush.msra.mxu0 0.0
      %310 = vmatpush.msra.mxu0 0.0
      %311 = vmatpush.msra.mxu0 0.0
      %312 = vmatpush.msra.mxu0 0.0
      %313 = vmatpush.msra.mxu0 0.0
      %314 = vmatpush.msra.mxu0 0.0
      %315 = vmatpush.msra.mxu0 0.0
      %316 = vmatpush.msra.mxu0 0.0
      %317 = vmatpush.msra.mxu0 0.0
      %318 = vmatpush.msra.mxu0 0.0
      %319 = vmatpush.msra.mxu0 0.0
      %320 = vmatpush.msra.mxu0 0.0
      %321 = vmatpush.msra.mxu0 %v296
      %322 = vmatpush.msra.mxu0 %v295
      %323 = vmatpush.msra.mxu0 %v294
      %324 = vmatpush.msra.mxu0 %v293
      %325 = vmatmul.f32.gmra.mxu0 %v307
      %v326 = vpop.f32.mrf.mxu0
      %v327 = vadd.f32 0.0, %v326
      %328 = vdwg.mxu0
      %v329 = vmul.f32 %v327, 0.17677669
      %330 = vmatpush.msra.mxu0 0.0
      %331 = vmatpush.msra.mxu0 0.0
      %332 = vmatpush.msra.mxu0 0.0
      %333 = vmatpush.msra.mxu0 0.0
      %334 = vmatpush.msra.mxu0 0.0
      %335 = vmatpush.msra.mxu0 0.0
      %336 = vmatpush.msra.mxu0 0.0
      %337 = vmatpush.msra.mxu0 0.0
      %338 = vmatpush.msra.mxu0 0.0
      %339 = vmatpush.msra.mxu0 0.0
      %340 = vmatpush.msra.mxu0 0.0
      %341 = vmatpush.msra.mxu0 0.0
      %342 = vmatpush.msra.mxu0 %v300
      %343 = vmatpush.msra.mxu0 %v299
      %344 = vmatpush.msra.mxu0 %v298
      %345 = vmatpush.msra.mxu0 %v297
      %346 = vmatmul.f32.gmra.mxu0 %v307
      %v347 = vpop.f32.mrf.mxu0
      %v348 = vadd.f32 0.0, %v347
      %349 = vdwg.mxu0
      %vm350 = vcmask 64512
      %v352 = vsel %vm350, %v329, 0
      %v355 = vsel %vm350, %v348, 0
      %357 = vmatpush.xpose.msra.mxu0 0.0
      %358 = vmatpush.xpose.msra.mxu0 0.0
      %359 = vmatpush.xpose.msra.mxu0 0.0
      %360 = vmatpush.xpose.msra.mxu0 0.0
      %361 = vmatpush.xpose.msra.mxu0 0.0
      %362 = vmatpush.xpose.msra.mxu0 0.0
      %363 = vmatpush.xpose.msra.mxu0 0.0
      %364 = vmatpush.xpose.msra.mxu0 0.0
      %365 = vmatpush.xpose.msra.mxu0 0.0
      %366 = vmatpush.xpose.msra.mxu0 0.0
      %367 = vmatpush.xpose.msra.mxu0 0.0
      %368 = vmatpush.xpose.msra.mxu0 0.0
      %369 = vmatpush.xpose.msra.mxu0 0.0
      %370 = vmatpush.xpose.msra.mxu0 0.0
      %371 = vmatpush.xpose.msra.mxu0 0.0
      %372 = vmatpush.xpose.msra.mxu0 %v355
      %373 = vmatmul.f32.gmra.mxu0 %v352
      %v374 = vpop.f32.mrf.mxu0
      %v375 = vadd.f32 %v292, %v374
      %376 = vdwg.mxu0
      %v377 = vsel %vm350, %v375, -inf
      %378 = vmax.xlane.f32.xlu0 %v377
      %v379 = vpop.xlane.xlu0 %378
      %v380 = vsub.f32 %v375, %v379
      %v381 = vmul.f32 %v380, 1.442695
      %v382 = vpow.pop %v381
      %v383 = vsel %vm350, %v382, 0.0
      %384 = vadd.xlane.f32.xlu0 %v383
      %v385 = vpop.xlane.xlu0 %384
      %v386 = vrcp.pop %v385
      %v387 = vmul.f32 %v382, %v386
      %388 = vrot.lane.b32.xlu0 %v348, 96
      %v389 = vpop.permute.xlu0 %388
      %v392 = vsel %vm350, %v387, 0
      %394 = vmatpush.msra.mxu0 0.0
      %395 = vmatpush.msra.mxu0 0.0
      %396 = vmatpush.msra.mxu0 0.0
      %397 = vmatpush.msra.mxu0 0.0
      %398 = vmatpush.msra.mxu0 0.0
      %399 = vmatpush.msra.mxu0 0.0
      %400 = vmatpush.msra.mxu0 0.0
      %401 = vmatpush.msra.mxu0 0.0
      %402 = vmatpush.msra.mxu0 0.0
      %403 = vmatpush.msra.mxu0 0.0
      %404 = vmatpush.msra.mxu0 0.0
      %405 = vmatpush.msra.mxu0 0.0
      %406 = vmatpush.msra.mxu0 0.0
      %407 = vmatpush.msra.mxu0 0.0
      %408 = vmatpush.msra.mxu0 0.0
      %409 = vmatpush.msra.mxu0 %v389
      %410 = vmatmul.f32.gmra.mxu0 %v392
      %v411 = vpop.f32.mrf.mxu0
      %v412 = vadd.f32 0.0, %v411
      %413 = vdwg.mxu0
      %414 = vrot.lane.b32.xlu0 %v329, 120
      %v415 = vpop.permute.xlu0 %414
      %416 = vrot.lane.b32.xlu0 %v348, 120
      %v417 = vpop.permute.xlu0 %416
      %v418 = vsel %vm350, %v415, 0
      %v420 = vsel %vm350, %v417, 0
      %422 = vmatpush.xpose.msra.mxu0 0.0
      %423 = vmatpush.xpose.msra.mxu0 0.0
      %424 = vmatpush.xpose.msra.mxu0 0.0
      %425 = vmatpush.xpose.msra.mxu0 0.0
      %426 = vmatpush.xpose.msra.mxu0 0.0
      %427 = vmatpush.xpose.msra.mxu0 0.0
      %428 = vmatpush.xpose.msra.mxu0 0.0
      %429 = vmatpush.xpose.msra.mxu0 0.0
      %430 = vmatpush.xpose.msra.mxu0 0.0
      %431 = vmatpush.xpose.msra.mxu0 0.0
      %432 = vmatpush.xpose.msra.mxu0 0.0
      %433 = vmatpush.xpose.msra.mxu0 0.0
      %434 = vmatpush.xpose.msra.mxu0 0.0
      %435 = vmatpush.xpose.msra.mxu0 0.0
      %436 = vmatpush.xpose.msra.mxu0 0.0
      %437 = vmatpush.xpose.msra.mxu0 %v420
      %438 = vmatmul.f32.gmra.mxu0 %v418
      %v439 = vpop.f32.mrf.mxu0
      %v440 = vadd.f32 %v292, %v439
      %441 = vdwg.mxu0
      %v442 = vsel %vm350, %v440, -inf
      %443 = vmax.xlane.f32.xlu0 %v442
      %v444 = vpop.xlane.xlu0 %443
      %v445 = vsub.f32 %v440, %v444
      %v446 = vmul.f32 %v445, 1.442695
      %v447 = vpow.pop %v446
      %v448 = vsel %vm350, %v447, 0.0
      %449 = vadd.xlane.f32.xlu0 %v448
      %v450 = vpop.xlane.xlu0 %449
      %v451 = vrcp.pop %v450
      %v452 = vmul.f32 %v447, %v451
      %453 = vrot.lane.b32.xlu0 %v348, 88
      %v454 = vpop.permute.xlu0 %453
      %v457 = vsel %vm350, %v452, 0
      %459 = vmatpush.msra.mxu0 0.0
      %460 = vmatpush.msra.mxu0 0.0
      %461 = vmatpush.msra.mxu0 0.0
      %462 = vmatpush.msra.mxu0 0.0
      %463 = vmatpush.msra.mxu0 0.0
      %464 = vmatpush.msra.mxu0 0.0
      %465 = vmatpush.msra.mxu0 0.0
      %466 = vmatpush.msra.mxu0 0.0
      %467 = vmatpush.msra.mxu0 0.0
      %468 = vmatpush.msra.mxu0 0.0
      %469 = vmatpush.msra.mxu0 0.0
      %470 = vmatpush.msra.mxu0 0.0
      %471 = vmatpush.msra.mxu0 0.0
      %472 = vmatpush.msra.mxu0 0.0
      %473 = vmatpush.msra.mxu0 0.0
      %474 = vmatpush.msra.mxu0 %v454
      %475 = vmatmul.f32.gmra.mxu0 %v457
      %v476 = vpop.f32.mrf.mxu0
      %v477 = vadd.f32 0.0, %v476
      %478 = vdwg.mxu0
      %479 = vrot.lane.b32.xlu0 %v329, 112
      %v480 = vpop.permute.xlu0 %479
      %481 = vrot.lane.b32.xlu0 %v348, 112
      %v482 = vpop.permute.xlu0 %481
      %v483 = vsel %vm350, %v480, 0
      %v485 = vsel %vm350, %v482, 0
      %487 = vmatpush.xpose.msra.mxu0 0.0
      %488 = vmatpush.xpose.msra.mxu0 0.0
      %489 = vmatpush.xpose.msra.mxu0 0.0
      %490 = vmatpush.xpose.msra.mxu0 0.0
      %491 = vmatpush.xpose.msra.mxu0 0.0
      %492 = vmatpush.xpose.msra.mxu0 0.0
      %493 = vmatpush.xpose.msra.mxu0 0.0
      %494 = vmatpush.xpose.msra.mxu0 0.0
      %495 = vmatpush.xpose.msra.mxu0 0.0
      %496 = vmatpush.xpose.msra.mxu0 0.0
      %497 = vmatpush.xpose.msra.mxu0 0.0
      %498 = vmatpush.xpose.msra.mxu0 0.0
      %499 = vmatpush.xpose.msra.mxu0 0.0
      %500 = vmatpush.xpose.msra.mxu0 0.0
      %501 = vmatpush.xpose.msra.mxu0 0.0
      %502 = vmatpush.xpose.msra.mxu0 %v485
      %503 = vmatmul.f32.gmra.mxu0 %v483
      %v504 = vpop.f32.mrf.mxu0
      %v505 = vadd.f32 %v292, %v504
      %506 = vdwg.mxu0
      %v507 = vsel %vm350, %v505, -inf
      %508 = vmax.xlane.f32.xlu0 %v507
      %v509 = vpop.xlane.xlu0 %508
      %v510 = vsub.f32 %v505, %v509
      %v511 = vmul.f32 %v510, 1.442695
      %v512 = vpow.pop %v511
      %v513 = vsel %vm350, %v512, 0.0
      %514 = vadd.xlane.f32.xlu0 %v513
      %v515 = vpop.xlane.xlu0 %514
      %v516 = vrcp.pop %v515
      %v517 = vmul.f32 %v512, %v516
      %518 = vrot.lane.b32.xlu0 %v348, 80
      %v519 = vpop.permute.xlu0 %518
      %v522 = vsel %vm350, %v517, 0
      %524 = vmatpush.msra.mxu0 0.0
      %525 = vmatpush.msra.mxu0 0.0
      %526 = vmatpush.msra.mxu0 0.0
      %527 = vmatpush.msra.mxu0 0.0
      %528 = vmatpush.msra.mxu0 0.0
      %529 = vmatpush.msra.mxu0 0.0
      %530 = vmatpush.msra.mxu0 0.0
      %531 = vmatpush.msra.mxu0 0.0
      %532 = vmatpush.msra.mxu0 0.0
      %533 = vmatpush.msra.mxu0 0.0
      %534 = vmatpush.msra.mxu0 0.0
      %535 = vmatpush.msra.mxu0 0.0
      %536 = vmatpush.msra.mxu0 0.0
      %537 = vmatpush.msra.mxu0 0.0
      %538 = vmatpush.msra.mxu0 0.0
      %539 = vmatpush.msra.mxu0 %v519
      %540 = vmatmul.f32.gmra.mxu0 %v522
      %v541 = vpop.f32.mrf.mxu0
      %v542 = vadd.f32 0.0, %v541
      %543 = vdwg.mxu0
      %544 = vrot.lane.b32.xlu0 %v329, 104
      %v545 = vpop.permute.xlu0 %544
      %546 = vrot.lane.b32.xlu0 %v348, 104
      %v547 = vpop.permute.xlu0 %546
      %v548 = vsel %vm350, %v545, 0
      %v550 = vsel %vm350, %v547, 0
      %552 = vmatpush.xpose.msra.mxu0 0.0
      %553 = vmatpush.xpose.msra.mxu0 0.0
      %554 = vmatpush.xpose.msra.mxu0 0.0
      %555 = vmatpush.xpose.msra.mxu0 0.0
      %556 = vmatpush.xpose.msra.mxu0 0.0
      %557 = vmatpush.xpose.msra.mxu0 0.0
      %558 = vmatpush.xpose.msra.mxu0 0.0
      %559 = vmatpush.xpose.msra.mxu0 0.0
      %560 = vmatpush.xpose.msra.mxu0 0.0
      %561 = vmatpush.xpose.msra.mxu0 0.0
      %562 = vmatpush.xpose.msra.mxu0 0.0
      %563 = vmatpush.xpose.msra.mxu0 0.0
      %564 = vmatpush.xpose.msra.mxu0 0.0
      %565 = vmatpush.xpose.msra.mxu0 0.0
      %566 = vmatpush.xpose.msra.mxu0 0.0
      %567 = vmatpush.xpose.msra.mxu0 %v550
      %568 = vmatmul.f32.gmra.mxu0 %v548
      %v569 = vpop.f32.mrf.mxu0
      %v570 = vadd.f32 %v292, %v569
      %571 = vdwg.mxu0
      %v572 = vsel %vm350, %v570, -inf
      %573 = vmax.xlane.f32.xlu0 %v572
      %v574 = vpop.xlane.xlu0 %573
      %v575 = vsub.f32 %v570, %v574
      %v576 = vmul.f32 %v575, 1.442695
      %v577 = vpow.pop %v576
      %v578 = vsel %vm350, %v577, 0.0
      %579 = vadd.xlane.f32.xlu0 %v578
      %v580 = vpop.xlane.xlu0 %579
      %v581 = vrcp.pop %v580
      %v582 = vmul.f32 %v577, %v581
      %583 = vrot.lane.b32.xlu0 %v348, 72
      %v584 = vpop.permute.xlu0 %583
      %v587 = vsel %vm350, %v582, 0
      %589 = vmatpush.msra.mxu0 0.0
      %590 = vmatpush.msra.mxu0 0.0
      %591 = vmatpush.msra.mxu0 0.0
      %592 = vmatpush.msra.mxu0 0.0
      %593 = vmatpush.msra.mxu0 0.0
      %594 = vmatpush.msra.mxu0 0.0
      %595 = vmatpush.msra.mxu0 0.0
      %596 = vmatpush.msra.mxu0 0.0
      %597 = vmatpush.msra.mxu0 0.0
      %598 = vmatpush.msra.mxu0 0.0
      %599 = vmatpush.msra.mxu0 0.0
      %600 = vmatpush.msra.mxu0 0.0
      %601 = vmatpush.msra.mxu0 0.0
      %602 = vmatpush.msra.mxu0 0.0
      %603 = vmatpush.msra.mxu0 0.0
      %604 = vmatpush.msra.mxu0 %v584
      %605 = vmatmul.f32.gmra.mxu0 %v587
      %v606 = vpop.f32.mrf.mxu0
      %v607 = vadd.f32 0.0, %v606
      %608 = vdwg.mxu0
      %610 = vrot.lane.b32.xlu0 %v477, 8
      %v611 = vpop.permute.xlu0 %610
      %614 = vrot.lane.b32.xlu0 %v542, 16
      %v615 = vpop.permute.xlu0 %614
      %618 = vrot.lane.b32.xlu0 %v607, 24
      %v619 = vpop.permute.xlu0 %618
      %v621 = vsel %vm350, %v412, %v611
      %vm622 = vcmask 130048
      %v623 = vsel %vm622, %v621, %v615
      %vm624 = vcmask 195584
      %v625 = vsel %vm624, %v623, %v619
      %v626 = vld [vmem:[%s5] sm:$0x1]
      %v627 = vld [vmem:[%s6] sm:$0x1]
      %v629 = vsel %vm305, %v625, 0
      %631 = vmatpush.msra.mxu0 0.0
      %632 = vmatpush.msra.mxu0 0.0
      %633 = vmatpush.msra.mxu0 0.0
      %634 = vmatpush.msra.mxu0 0.0
      %635 = vmatpush.msra.mxu0 0.0
      %636 = vmatpush.msra.mxu0 0.0
      %637 = vmatpush.msra.mxu0 0.0
      %638 = vmatpush.msra.mxu0 0.0
      %639 = vmatpush.msra.mxu0 0.0
      %640 = vmatpush.msra.mxu0 0.0
      %641 = vmatpush.msra.mxu0 0.0
      %642 = vmatpush.msra.mxu0 0.0
      %643 = vmatpush.msra.mxu0 %v304
      %644 = vmatpush.msra.mxu0 %v303
      %645 = vmatpush.msra.mxu0 %v302
      %646 = vmatpush.msra.mxu0 %v301
      %647 = vmatmul.f32.gmra.mxu0 %v629
      %v648 = vpop.f32.mrf.mxu0
      %v649 = vadd.f32 %v291, %v648
      %650 = vdwg.mxu0
      %v651 = vsel %vm305, %v649, 0.0
      %652 = vadd.xlane.f32.xlu0 %v651
      %v653 = vpop.xlane.xlu0 %652
      %v654 = vrcp.pop 32.0
      %v655 = vmul.f32 32.0, %v654
      %v656 = vsub.f32 1.0, %v655
      %v657 = vmul.f32 %v654, %v656
      %v658 = vadd.f32 %v654, %v657
      %vm659 = vweird.f32 %v654
      %v660 = vsel %vm659, %v654, %v658
      %v661 = vmul.f32 %v653, %v660
      %v662 = vsub.f32 %v649, %v661
      %v663 = vmul.f32 %v662, %v662
      %v664 = vsel %vm305, %v663, 0.0
      %665 = vadd.xlane.f32.xlu0 %v664
      %v666 = vpop.xlane.xlu0 %665
      %v667 = vmul.f32 %v666, %v660
      %v668 = vadd.f32 %v667, 1e-05
      %v669 = vrsqrt.pop %v668
      %v670 = vmul.f32 %v669, %v668
      %v671 = vmul.f32 %v670, %v669
      %v672 = vmul.f32 0.5, %v671
      %v673 = vsub.f32 1.5, %v672
      %v674 = vmul.f32 %v669, %v673
      %vm675 = vweird.f32 %v668
      %vm676 = vweird.f32 %v669
      %vm677 = vmor %vm675, %vm676
      %v678 = vsel %vm677, %v669, %v674
      %v679 = vmul.f32 %v662, %v678
      %v681 = vperm.slane %v626, 0
      %v683 = vmul.f32 %v679, %v681
      %v685 = vperm.slane %v627, 0
      %v687 = vadd.f32 %v683, %v685
      %688 = vst.msk [vmem:[%s290] sm:$0xff] %vm305, %v687
      %p689 = scmp.lt.s32.totalorder %s18, 1
      %s690 = scalar_select %p689, %s18, 1
      %s691 = smul.addr %s690, 8
      %s692 = scalar_lea.vmem %s7, %s691
      // Predicated region
      $region49: #{_lambda_.9} parent=47 // pred_check
        %p693 = pneg %p193
      $region50: #{_lambda_.9} parent=47 // pred_check_branch
        %695 = sbr.rel (%p693) target = $region52
      $region51: #{_lambda_.9} parent=47 // pred_region
        _
      $region52: #{_lambda_.9} parent=47 // pred_fallthru
        _
    $region48: #{_lambda_.9} parent=5 // pred_fallthru
      _
    %p696 = scmp.le.s32.totalorder 2, %s13
    // Predicated region
    $region53: #{_lambda_.9} parent=5 // pred_check
      %p697 = pneg %p696
    $region54: #{_lambda_.9} parent=5 // pred_check_branch
      %699 = sbr.rel (%p697) target = $region56
    $region55: #{_lambda_.9} parent=5 // pred_region
      %s700 = ssub.s32 %s13, 2
      // Predicated region
      $region57: #{_lambda_.9} parent=55 // pred_check
        %p701 = pneg %p199
      $region58: #{_lambda_.9} parent=55 // pred_check_branch
        %703 = sbr.rel (%p701) target = $region60
      $region59: #{_lambda_.9} parent=55 // pred_region
        %p704 = scmp.lt.s32.totalorder %s19, 1
        %s705 = scalar_select %p704, %s19, 1
        %s706 = smul.addr %s705, 8
        %s707 = scalar_lea.vmem %s7, %s706
      $region60: #{_lambda_.9} parent=55 // pred_fallthru
        _
    $region56: #{_lambda_.9} parent=5 // pred_fallthru
      _
  $region6: #{_lambda_.9} parent=0 // loop_footer
    %s17 = sadd.s32 1, %s13
  $region7: #{_lambda_.9} parent=0 // loop_footer_branch
    %12 = sbr.rel target = $region3
  $region8: #{_lambda_.9} parent=0 // loop_exit
    _

// kernel: _lambda_.7
$region0: #{_lambda_.7}
  #allocation0 [shape = 'u32[]', space=smem, size = 0x4, offset = 0x4, fixed_abs, tag = 'smem constant byte address 0x4 - core index']
  #allocation1 [shape = 'u32[72,128]{1,0:T(1,128)}', space=vmem, size = 0x9000, scoped, tag = 'internal scratch']
  %s0 = inlined_call_operand.vmem [shape: f32[2,8,32], index: 0, kind: input, shape index: {}, may-alias: {0,1}]
  %s1 = inlined_call_operand.vmem [shape: f32[2,8,32], index: 1, kind: input, shape index: {}, may-alias: {0,1}]
  %s2 = inlined_call_operand.vmem [shape: f32[2,8,8], index: 2, kind: input, shape index: {}]
  %s3 = inlined_call_operand.vmem [shape: f32[32,32], index: 3, kind: input, shape index: {}]
  %s4 = inlined_call_operand.vmem [shape: f32[32,64], index: 4, kind: input, shape index: {}]
  %s5 = inlined_call_operand.vmem [shape: f32[32,32], index: 5, kind: input, shape index: {}]
  %s6 = inlined_call_operand.vmem [shape: f32[1,32], index: 6, kind: input, shape index: {}]
  %s7 = inlined_call_operand.vmem [shape: f32[1,32], index: 7, kind: input, shape index: {}]
  %s8 = inlined_call_operand.vmem [shape: f32[32,128], index: 8, kind: input, shape index: {}]
  %s9 = inlined_call_operand.vmem [shape: f32[1,128], index: 9, kind: input, shape index: {}]
  %s10 = inlined_call_operand.vmem [shape: f32[128,32], index: 10, kind: input, shape index: {}]
  %s11 = inlined_call_operand.vmem [shape: f32[1,32], index: 11, kind: input, shape index: {}]
  %s12 = inlined_call_operand.vmem [shape: f32[1,32], index: 12, kind: input, shape index: {}]
  %s13 = inlined_call_operand.vmem [shape: f32[1,32], index: 13, kind: input, shape index: {}]
  %s14 = inlined_call_operand.vmem [shape: f32[2,8,32], index: 14, kind: output, shape index: {}]
  %s15 = sld [smem:[#allocation0]]
  $region89: #{_lambda_.7} parent=0
    _
  %s17 = ssub.s32 1, %s15
  %s18 = scalar_select 0, %s17, %s15
  loop: start=0, step=1, limit=4
  $region2: #{_lambda_.7} parent=0 // loop_pre_header
    _
  $region3: #{_lambda_.7} parent=0 // loop_header
    %s20 = sphi 0, %s24
    %p21 = scmp.ge.s32.totalorder %s20, 4
    %s30 = sphi 0, %s32
    %s33 = sphi 0, %s30
    %s34 = sphi 0, %s33
    %s50 = sphi 0, %s34
    %s56 = sphi 0, %s58
    %s59 = sphi 0, %s56
    %s60 = sphi 0, %s59
    %s76 = sphi 0, %s60
    %s82 = sphi 0, %s84
    %s85 = sphi 0, %s82
    %s86 = sphi 0, %s85
    %s102 = sphi 0, %s86
    %s106 = sphi 0, %s106
    %s108 = sphi 0, %s106
    %s109 = sphi 0, %s108
    %s123 = sphi 0, %s109
    %s127 = sphi 0, %s127
    %s129 = sphi 0, %s127
    %s130 = sphi 0, %s129
    %s144 = sphi 0, %s130
    %s148 = sphi 0, %s148
    %s150 = sphi 0, %s148
    %s151 = sphi 0, %s150
    %s165 = sphi 0, %s151
    %s169 = sphi 0, %s169
    %s171 = sphi 0, %s169
    %s172 = sphi 0, %s171
    %s186 = sphi 0, %s172
    %s190 = sphi 0, %s190
    %s192 = sphi 0, %s190
    %s193 = sphi 0, %s192
    %s207 = sphi 0, %s193
    %s211 = sphi 0, %s211
    %s213 = sphi 0, %s211
    %s214 = sphi 0, %s213
    %s228 = sphi 0, %s214
    %s232 = sphi 0, %s232
    %s234 = sphi 0, %s232
    %s235 = sphi 0, %s234
    %s249 = sphi 0, %s235
    %s253 = sphi 0, %s253
    %s255 = sphi 0, %s253
    %s256 = sphi 0, %s255
    %s270 = sphi 0, %s256
    %s274 = sphi 0, %s274
    %s276 = sphi 0, %s274
    %s277 = sphi 0, %s276
    %s291 = sphi 0, %s277
    %s295 = sphi 0, %s295
    %s297 = sphi 0, %s295
    %s298 = sphi 0, %s297
    %s312 = sphi 0, %s298
    %s316 = sphi 0, %s316
    %s318 = sphi 0, %s316
    %s319 = sphi 0, %s318
    %s333 = sphi 0, %s319
    %s339 = sphi 0, %s341
    %s342 = sphi 0, %s339
    %s343 = sphi 0, %s342
    %s359 = sphi 0, %s343
  $region4: #{_lambda_.7} parent=0 // loop_header_branch
    %23 = sbr.rel (%p21) target = $region8
  $region5: #{_lambda_.7} parent=0 // loop_body
    %s25 = ssub.s32 %s20, 1
    %s26 = ssub.s32 %s20, 2
    %s27 = sadd.s32 %s20, 1
    %s28 = ssub.s32 %s20, %s27
    %p29 = scmp.eq.s32.totalorder %s28, 0
    %s31 = sadd.s32 %s30, 1
    %s32 = scalar_select %p29, %s30, %s31
    %p35 = pneg %p29
    %p36 = scmp.eq.s32.totalorder %s20, 1
    %p37 = por %p35, %p36
    %p38 = scmp.ne.s32.totalorder %s30, %s33
    %p39 = scmp.eq.s32.totalorder %s20, 0
    %p40 = por %p38, %p39
    %p41 = scmp.ne.s32.totalorder %s30, %s33
    %p42 = scmp.eq.s32.totalorder %s25, 1
    %p43 = por %p41, %p42
    %p44 = scmp.ne.s32.totalorder %s33, %s34
    %p45 = scmp.eq.s32.totalorder %s25, 0
    %p46 = por %p44, %p45
    %p47 = scmp.ne.s32.totalorder %s33, %s34
    %p48 = scmp.eq.s32.totalorder %s26, 1
    %p49 = por %p47, %p48
    %p51 = scmp.ne.s32.totalorder %s34, %s50
    %p52 = scmp.eq.s32.totalorder %s26, 0
    %p53 = por %p51, %p52
    %s54 = ssub.s32 %s20, %s27
    %p55 = scmp.eq.s32.totalorder %s54, 0
    %s57 = sadd.s32 %s56, 1
    %s58 = scalar_select %p55, %s56, %s57
    %p61 = pneg %p55
    %p62 = scmp.eq.s32.totalorder %s20, 1
    %p63 = por %p61, %p62
    %p64 = scmp.ne.s32.totalorder %s56, %s59
    %p65 = scmp.eq.s32.totalorder %s20, 0
    %p66 = por %p64, %p65
    %p67 = scmp.ne.s32.totalorder %s56, %s59
    %p68 = scmp.eq.s32.totalorder %s25, 1
    %p69 = por %p67, %p68
    %p70 = scmp.ne.s32.totalorder %s59, %s60
    %p71 = scmp.eq.s32.totalorder %s25, 0
    %p72 = por %p70, %p71
    %p73 = scmp.ne.s32.totalorder %s59, %s60
    %p74 = scmp.eq.s32.totalorder %s26, 1
    %p75 = por %p73, %p74
    %p77 = scmp.ne.s32.totalorder %s60, %s76
    %p78 = scmp.eq.s32.totalorder %s26, 0
    %p79 = por %p77, %p78
    %s80 = ssub.s32 %s20, %s27
    %p81 = scmp.eq.s32.totalorder %s80, 0
    %s83 = sadd.s32 %s82, 1
    %s84 = scalar_select %p81, %s82, %s83
    %p87 = pneg %p81
    %p88 = scmp.eq.s32.totalorder %s20, 1
    %p89 = por %p87, %p88
    %p90 = scmp.ne.s32.totalorder %s82, %s85
    %p91 = scmp.eq.s32.totalorder %s20, 0
    %p92 = por %p90, %p91
    %p93 = scmp.ne.s32.totalorder %s82, %s85
    %p94 = scmp.eq.s32.totalorder %s25, 1
    %p95 = por %p93, %p94
    %p96 = scmp.ne.s32.totalorder %s85, %s86
    %p97 = scmp.eq.s32.totalorder %s25, 0
    %p98 = por %p96, %p97
    %p99 = scmp.ne.s32.totalorder %s85, %s86
    %p100 = scmp.eq.s32.totalorder %s26, 1
    %p101 = por %p99, %p100
    %p103 = scmp.ne.s32.totalorder %s86, %s102
    %p104 = scmp.eq.s32.totalorder %s26, 0
    %p105 = por %p103, %p104
    %s107 = sadd.s32 %s106, 1
    %p110 = scmp.eq.s32.totalorder %s20, 1
    %p111 = scmp.ne.s32.totalorder %s106, %s108
    %p112 = scmp.eq.s32.totalorder %s20, 0
    %p113 = por %p111, %p112
    %p114 = scmp.ne.s32.totalorder %s106, %s108
    %p115 = scmp.eq.s32.totalorder %s25, 1
    %p116 = por %p114, %p115
    %p117 = scmp.ne.s32.totalorder %s108, %s109
    %p118 = scmp.eq.s32.totalorder %s25, 0
    %p119 = por %p117, %p118
    %p120 = scmp.ne.s32.totalorder %s108, %s109
    %p121 = scmp.eq.s32.totalorder %s26, 1
    %p122 = por %p120, %p121
    %p124 = scmp.ne.s32.totalorder %s109, %s123
    %p125 = scmp.eq.s32.totalorder %s26, 0
    %p126 = por %p124, %p125
    %s128 = sadd.s32 %s127, 1
    %p131 = scmp.eq.s32.totalorder %s20, 1
    %p132 = scmp.ne.s32.totalorder %s127, %s129
    %p133 = scmp.eq.s32.totalorder %s20, 0
    %p134 = por %p132, %p133
    %p135 = scmp.ne.s32.totalorder %s127, %s129
    %p136 = scmp.eq.s32.totalorder %s25, 1
    %p137 = por %p135, %p136
    %p138 = scmp.ne.s32.totalorder %s129, %s130
    %p139 = scmp.eq.s32.totalorder %s25, 0
    %p140 = por %p138, %p139
    %p141 = scmp.ne.s32.totalorder %s129, %s130
    %p142 = scmp.eq.s32.totalorder %s26, 1
    %p143 = por %p141, %p142
    %p145 = scmp.ne.s32.totalorder %s130, %s144
    %p146 = scmp.eq.s32.totalorder %s26, 0
    %p147 = por %p145, %p146
    %s149 = sadd.s32 %s148, 1
    %p152 = scmp.eq.s32.totalorder %s20, 1
    %p153 = scmp.ne.s32.totalorder %s148, %s150
    %p154 = scmp.eq.s32.totalorder %s20, 0
    %p155 = por %p153, %p154
    %p156 = scmp.ne.s32.totalorder %s148, %s150
    %p157 = scmp.eq.s32.totalorder %s25, 1
    %p158 = por %p156, %p157
    %p159 = scmp.ne.s32.totalorder %s150, %s151
    %p160 = scmp.eq.s32.totalorder %s25, 0
    %p161 = por %p159, %p160
    %p162 = scmp.ne.s32.totalorder %s150, %s151
    %p163 = scmp.eq.s32.totalorder %s26, 1
    %p164 = por %p162, %p163
    %p166 = scmp.ne.s32.totalorder %s151, %s165
    %p167 = scmp.eq.s32.totalorder %s26, 0
    %p168 = por %p166, %p167
    %s170 = sadd.s32 %s169, 1
    %p173 = scmp.eq.s32.totalorder %s20, 1
    %p174 = scmp.ne.s32.totalorder %s169, %s171
    %p175 = scmp.eq.s32.totalorder %s20, 0
    %p176 = por %p174, %p175
    %p177 = scmp.ne.s32.totalorder %s169, %s171
    %p178 = scmp.eq.s32.totalorder %s25, 1
    %p179 = por %p177, %p178
    %p180 = scmp.ne.s32.totalorder %s171, %s172
    %p181 = scmp.eq.s32.totalorder %s25, 0
    %p182 = por %p180, %p181
    %p183 = scmp.ne.s32.totalorder %s171, %s172
    %p184 = scmp.eq.s32.totalorder %s26, 1
    %p185 = por %p183, %p184
    %p187 = scmp.ne.s32.totalorder %s172, %s186
    %p188 = scmp.eq.s32.totalorder %s26, 0
    %p189 = por %p187, %p188
    %s191 = sadd.s32 %s190, 1
    %p194 = scmp.eq.s32.totalorder %s20, 1
    %p195 = scmp.ne.s32.totalorder %s190, %s192
    %p196 = scmp.eq.s32.totalorder %s20, 0
    %p197 = por %p195, %p196
    %p198 = scmp.ne.s32.totalorder %s190, %s192
    %p199 = scmp.eq.s32.totalorder %s25, 1
    %p200 = por %p198, %p199
    %p201 = scmp.ne.s32.totalorder %s192, %s193
    %p202 = scmp.eq.s32.totalorder %s25, 0
    %p203 = por %p201, %p202
    %p204 = scmp.ne.s32.totalorder %s192, %s193
    %p205 = scmp.eq.s32.totalorder %s26, 1
    %p206 = por %p204, %p205
    %p208 = scmp.ne.s32.totalorder %s193, %s207
    %p209 = scmp.eq.s32.totalorder %s26, 0
    %p210 = por %p208, %p209
    %s212 = sadd.s32 %s211, 1
    %p215 = scmp.eq.s32.totalorder %s20, 1
    %p216 = scmp.ne.s32.totalorder %s211, %s213
    %p217 = scmp.eq.s32.totalorder %s20, 0
    %p218 = por %p216, %p217
    %p219 = scmp.ne.s32.totalorder %s211, %s213
    %p220 = scmp.eq.s32.totalorder %s25, 1
    %p221 = por %p219, %p220
    %p222 = scmp.ne.s32.totalorder %s213, %s214
    %p223 = scmp.eq.s32.totalorder %s25, 0
    %p224 = por %p222, %p223
    %p225 = scmp.ne.s32.totalorder %s213, %s214
    %p226 = scmp.eq.s32.totalorder %s26, 1
    %p227 = por %p225, %p226
    %p229 = scmp.ne.s32.totalorder %s214, %s228
    %p230 = scmp.eq.s32.totalorder %s26, 0
    %p231 = por %p229, %p230
    %s233 = sadd.s32 %s232, 1
    %p236 = scmp.eq.s32.totalorder %s20, 1
    %p237 = scmp.ne.s32.totalorder %s232, %s234
    %p238 = scmp.eq.s32.totalorder %s20, 0
    %p239 = por %p237, %p238
    %p240 = scmp.ne.s32.totalorder %s232, %s234
    %p241 = scmp.eq.s32.totalorder %s25, 1
    %p242 = por %p240, %p241
    %p243 = scmp.ne.s32.totalorder %s234, %s235
    %p244 = scmp.eq.s32.totalorder %s25, 0
    %p245 = por %p243, %p244
    %p246 = scmp.ne.s32.totalorder %s234, %s235
    %p247 = scmp.eq.s32.totalorder %s26, 1
    %p248 = por %p246, %p247
    %p250 = scmp.ne.s32.totalorder %s235, %s249
    %p251 = scmp.eq.s32.totalorder %s26, 0
    %p252 = por %p250, %p251
    %s254 = sadd.s32 %s253, 1
    %p257 = scmp.eq.s32.totalorder %s20, 1
    %p258 = scmp.ne.s32.totalorder %s253, %s255
    %p259 = scmp.eq.s32.totalorder %s20, 0
    %p260 = por %p258, %p259
    %p261 = scmp.ne.s32.totalorder %s253, %s255
    %p262 = scmp.eq.s32.totalorder %s25, 1
    %p263 = por %p261, %p262
    %p264 = scmp.ne.s32.totalorder %s255, %s256
    %p265 = scmp.eq.s32.totalorder %s25, 0
    %p266 = por %p264, %p265
    %p267 = scmp.ne.s32.totalorder %s255, %s256
    %p268 = scmp.eq.s32.totalorder %s26, 1
    %p269 = por %p267, %p268
    %p271 = scmp.ne.s32.totalorder %s256, %s270
    %p272 = scmp.eq.s32.totalorder %s26, 0
    %p273 = por %p271, %p272
    %s275 = sadd.s32 %s274, 1
    %p278 = scmp.eq.s32.totalorder %s20, 1
    %p279 = scmp.ne.s32.totalorder %s274, %s276
    %p280 = scmp.eq.s32.totalorder %s20, 0
    %p281 = por %p279, %p280
    %p282 = scmp.ne.s32.totalorder %s274, %s276
    %p283 = scmp.eq.s32.totalorder %s25, 1
    %p284 = por %p282, %p283
    %p285 = scmp.ne.s32.totalorder %s276, %s277
    %p286 = scmp.eq.s32.totalorder %s25, 0
    %p287 = por %p285, %p286
    %p288 = scmp.ne.s32.totalorder %s276, %s277
    %p289 = scmp.eq.s32.totalorder %s26, 1
    %p290 = por %p288, %p289
    %p292 = scmp.ne.s32.totalorder %s277, %s291
    %p293 = scmp.eq.s32.totalorder %s26, 0
    %p294 = por %p292, %p293
    %s296 = sadd.s32 %s295, 1
    %p299 = scmp.eq.s32.totalorder %s20, 1
    %p300 = scmp.ne.s32.totalorder %s295, %s297
    %p301 = scmp.eq.s32.totalorder %s20, 0
    %p302 = por %p300, %p301
    %p303 = scmp.ne.s32.totalorder %s295, %s297
    %p304 = scmp.eq.s32.totalorder %s25, 1
    %p305 = por %p303, %p304
    %p306 = scmp.ne.s32.totalorder %s297, %s298
    %p307 = scmp.eq.s32.totalorder %s25, 0
    %p308 = por %p306, %p307
    %p309 = scmp.ne.s32.totalorder %s297, %s298
    %p310 = scmp.eq.s32.totalorder %s26, 1
    %p311 = por %p309, %p310
    %p313 = scmp.ne.s32.totalorder %s298, %s312
    %p314 = scmp.eq.s32.totalorder %s26, 0
    %p315 = por %p313, %p314
    %s317 = sadd.s32 %s316, 1
    %p320 = scmp.eq.s32.totalorder %s20, 1
    %p321 = scmp.ne.s32.totalorder %s316, %s318
    %p322 = scmp.eq.s32.totalorder %s20, 0
    %p323 = por %p321, %p322
    %p324 = scmp.ne.s32.totalorder %s316, %s318
    %p325 = scmp.eq.s32.totalorder %s25, 1
    %p326 = por %p324, %p325
    %p327 = scmp.ne.s32.totalorder %s318, %s319
    %p328 = scmp.eq.s32.totalorder %s25, 0
    %p329 = por %p327, %p328
    %p330 = scmp.ne.s32.totalorder %s318, %s319
    %p331 = scmp.eq.s32.totalorder %s26, 1
    %p332 = por %p330, %p331
    %p334 = scmp.ne.s32.totalorder %s319, %s333
    %p335 = scmp.eq.s32.totalorder %s26, 0
    %p336 = por %p334, %p335
    %s337 = ssub.s32 %s20, %s27
    %p338 = scmp.eq.s32.totalorder %s337, 0
    %s340 = sadd.s32 %s339, 1
    %s341 = scalar_select %p338, %s339, %s340
    %p344 = pneg %p338
    %p345 = scmp.eq.s32.totalorder %s20, 1
    %p346 = por %p344, %p345
    %p347 = scmp.ne.s32.totalorder %s339, %s342
    %p348 = scmp.eq.s32.totalorder %s20, 0
    %p349 = por %p347, %p348
    %p350 = scmp.ne.s32.totalorder %s339, %s342
    %p351 = scmp.eq.s32.totalorder %s25, 1
    %p352 = por %p350, %p351
    %p353 = scmp.ne.s32.totalorder %s342, %s343
    %p354 = scmp.eq.s32.totalorder %s25, 0
    %p355 = por %p353, %p354
    %p356 = scmp.ne.s32.totalorder %s342, %s343
    %p357 = scmp.eq.s32.totalorder %s26, 1
    %p358 = por %p356, %p357
    %p360 = scmp.ne.s32.totalorder %s343, %s359
    %p361 = scmp.eq.s32.totalorder %s26, 0
    %p362 = por %p360, %p361
    %p363 = scmp.le.s32.totalorder 1, %s20
    %p364 = scmp.lt.s32.totalorder %s20, 3
    %p365 = pnand %p363, %p364
    %p366 = pneg %p365
    // Predicated region
    $region9: #{_lambda_.7} parent=5 // pred_check
      _
    $region10: #{_lambda_.7} parent=5 // pred_check_branch
      %368 = sbr.rel (%p365) target = $region12
    $region11: #{_lambda_.7} parent=5 // pred_region
      %s369 = ssub.s32 %s20, 1
      // Predicated region
      $region13: #{_lambda_.7} parent=11 // pred_check
        %p370 = pneg %p119
      $region14: #{_lambda_.7} parent=11 // pred_check_branch
        %372 = sbr.rel (%p370) target = $region16
      $region15: #{_lambda_.7} parent=11 // pred_region
        _
      $region16: #{_lambda_.7} parent=11 // pred_fallthru
        _
      // Predicated region
      $region17: #{_lambda_.7} parent=11 // pred_check
        %p373 = pneg %p140
      $region18: #{_lambda_.7} parent=11 // pred_check_branch
        %375 = sbr.rel (%p373) target = $region20
      $region19: #{_lambda_.7} parent=11 // pred_region
        _
      $region20: #{_lambda_.7} parent=11 // pred_fallthru
        _
      // Predicated region
      $region21: #{_lambda_.7} parent=11 // pred_check
        %p376 = pneg %p161
      $region22: #{_lambda_.7} parent=11 // pred_check_branch
        %378 = sbr.rel (%p376) target = $region24
      $region23: #{_lambda_.7} parent=11 // pred_region
        _
      $region24: #{_lambda_.7} parent=11 // pred_fallthru
        _
      // Predicated region
      $region25: #{_lambda_.7} parent=11 // pred_check
        %p379 = pneg %p182
      $region26: #{_lambda_.7} parent=11 // pred_check_branch
        %381 = sbr.rel (%p379) target = $region28
      $region27: #{_lambda_.7} parent=11 // pred_region
        _
      $region28: #{_lambda_.7} parent=11 // pred_fallthru
        _
      // Predicated region
      $region29: #{_lambda_.7} parent=11 // pred_check
        %p382 = pneg %p203
      $region30: #{_lambda_.7} parent=11 // pred_check_branch
        %384 = sbr.rel (%p382) target = $region32
      $region31: #{_lambda_.7} parent=11 // pred_region
        _
      $region32: #{_lambda_.7} parent=11 // pred_fallthru
        _
      // Predicated region
      $region33: #{_lambda_.7} parent=11 // pred_check
        %p385 = pneg %p224
      $region34: #{_lambda_.7} parent=11 // pred_check_branch
        %387 = sbr.rel (%p385) target = $region36
      $region35: #{_lambda_.7} parent=11 // pred_region
        _
      $region36: #{_lambda_.7} parent=11 // pred_fallthru
        _
      // Predicated region
      $region37: #{_lambda_.7} parent=11 // pred_check
        %p388 = pneg %p245
      $region38: #{_lambda_.7} parent=11 // pred_check_branch
        %390 = sbr.rel (%p388) target = $region40
      $region39: #{_lambda_.7} parent=11 // pred_region
        _
      $region40: #{_lambda_.7} parent=11 // pred_fallthru
        _
      // Predicated region
      $region41: #{_lambda_.7} parent=11 // pred_check
        %p391 = pneg %p266
      $region42: #{_lambda_.7} parent=11 // pred_check_branch
        %393 = sbr.rel (%p391) target = $region44
      $region43: #{_lambda_.7} parent=11 // pred_region
        _
      $region44: #{_lambda_.7} parent=11 // pred_fallthru
        _
      // Predicated region
      $region45: #{_lambda_.7} parent=11 // pred_check
        %p394 = pneg %p287
      $region46: #{_lambda_.7} parent=11 // pred_check_branch
        %396 = sbr.rel (%p394) target = $region48
      $region47: #{_lambda_.7} parent=11 // pred_region
        _
      $region48: #{_lambda_.7} parent=11 // pred_fallthru
        _
      // Predicated region
      $region49: #{_lambda_.7} parent=11 // pred_check
        %p397 = pneg %p308
      $region50: #{_lambda_.7} parent=11 // pred_check_branch
        %399 = sbr.rel (%p397) target = $region52
      $region51: #{_lambda_.7} parent=11 // pred_region
        _
      $region52: #{_lambda_.7} parent=11 // pred_fallthru
        _
      // Predicated region
      $region53: #{_lambda_.7} parent=11 // pred_check
        %p400 = pneg %p329
      $region54: #{_lambda_.7} parent=11 // pred_check_branch
        %402 = sbr.rel (%p400) target = $region56
      $region55: #{_lambda_.7} parent=11 // pred_region
        _
      $region56: #{_lambda_.7} parent=11 // pred_fallthru
        _
    $region12: #{_lambda_.7} parent=5 // pred_fallthru
      _
    %p403 = scmp.lt.s32.totalorder %s20, 2
    // Predicated region
    $region57: #{_lambda_.7} parent=5 // pred_check
      %p404 = pneg %p403
    $region58: #{_lambda_.7} parent=5 // pred_check_branch
      %406 = sbr.rel (%p404) target = $region60
    $region59: #{_lambda_.7} parent=5 // pred_region
      // Predicated region
      $region61: #{_lambda_.7} parent=59 // pred_check
        %p407 = pneg %p40
      $region62: #{_lambda_.7} parent=59 // pred_check_branch
        %409 = sbr.rel (%p407) target = $region64
      $region63: #{_lambda_.7} parent=59 // pred_region
        %p410 = scmp.lt.s32.totalorder %s20, 1
        %s411 = scalar_select %p410, %s20, 1
        %s412 = smul.addr %s411, 8
        %s413 = scalar_lea.vmem %s0, %s412
      $region64: #{_lambda_.7} parent=59 // pred_fallthru
        _
      // Predicated region
      $region65: #{_lambda_.7} parent=59 // pred_check
        %p414 = pneg %p66
      $region66: #{_lambda_.7} parent=59 // pred_check_branch
        %416 = sbr.rel (%p414) target = $region68
      $region67: #{_lambda_.7} parent=59 // pred_region
        %p417 = scmp.lt.s32.totalorder %s20, 1
        %s418 = scalar_select %p417, %s20, 1
        %s419 = smul.addr %s418, 8
        %s420 = scalar_lea.vmem %s1, %s419
      $region68: #{_lambda_.7} parent=59 // pred_fallthru
        _
      // Predicated region
      $region69: #{_lambda_.7} parent=59 // pred_check
        %p421 = pneg %p92
      $region70: #{_lambda_.7} parent=59 // pred_check_branch
        %423 = sbr.rel (%p421) target = $region72
      $region71: #{_lambda_.7} parent=59 // pred_region
        %p424 = scmp.lt.s32.totalorder %s20, 1
        %s425 = scalar_select %p424, %s20, 1
        %s426 = smul.addr %s425, 8
        %s427 = scalar_lea.vmem %s2, %s426
      $region72: #{_lambda_.7} parent=59 // pred_fallthru
        _
    $region60: #{_lambda_.7} parent=5 // pred_fallthru
      _
    %p428 = scmp.le.s32.totalorder 1, %s20
    %p429 = scmp.lt.s32.totalorder %s20, 3
    %p430 = pnand %p428, %p429
    %p431 = pneg %p430
    // Predicated region
    $region73: #{_lambda_.7} parent=5 // pred_check
      _
    $region74: #{_lambda_.7} parent=5 // pred_check_branch
      %433 = sbr.rel (%p430) target = $region76
    $region75: #{_lambda_.7} parent=5 // pred_region
      %s434 = ssub.s32 %s20, 1
      %p435 = scmp.lt.s32.totalorder %s25, 1
      %s436 = scalar_select %p435, %s25, 1
      %s437 = smul.addr %s436, 8
      %s438 = scalar_lea.vmem %s0, %s437
      %p439 = pneg %p46
      %p440 = pneg %p43
      %p441 = scmp.lt.s32.totalorder %s25, 1
      %s442 = scalar_select %p441, %s25, 1
      %s443 = smul.addr %s442, 8
      %s444 = scalar_lea.vmem %s1, %s443
      %p445 = pneg %p72
      %p446 = pneg %p69
      %p447 = scmp.lt.s32.totalorder %s25, 1
      %s448 = scalar_select %p447, %s25, 1
      %s449 = smul.addr %s448, 8
      %s450 = scalar_lea.vmem %s2, %s449
      %p451 = pneg %p98
      %p452 = pneg %p95
      %p453 = pneg %p119
      %p454 = pneg %p116
      %p455 = pneg %p140
      %p456 = pneg %p137
      %p457 = pneg %p161
      %p458 = pneg %p158
      %p459 = pneg %p182
      %p460 = pneg %p179
      %p461 = pneg %p203
      %p462 = pneg %p200
      %p463 = pneg %p224
      %p464 = pneg %p221
      %p465 = pneg %p245
      %p466 = pneg %p242
      %p467 = pneg %p266
      %p468 = pneg %p263
      %p469 = pneg %p287
      %p470 = pneg %p284
      %p471 = pneg %p308
      %p472 = pneg %p305
      %p473 = pneg %p329
      %p474 = pneg %p326
      %p475 = pneg %p355
      %p476 = pneg %p352
      %p477 = scmp.lt.s32.totalorder %s25, 1
      %s478 = scalar_select %p477, %s25, 1
      %s479 = smul.addr %s478, 8
      %s480 = scalar_lea.vmem %s14, %s479
      %p481 = scmp.lt.s32.totalorder %s25, 1
      %s482 = scalar_select %p481, %s25, 1
      %s483 = smul.addr %s482, 8
      %s484 = scalar_lea.vmem %s0, %s483
      %p485 = scmp.lt.s32.totalorder %s25, 1
      %s486 = scalar_select %p485, %s25, 1
      %s487 = smul.addr %s486, 8
      %s488 = scalar_lea.vmem %s1, %s487
      %p489 = scmp.lt.s32.totalorder %s25, 1
      %s490 = scalar_select %p489, %s25, 1
      %s491 = smul.addr %s490, 8
      %s492 = scalar_lea.vmem %s2, %s491
      %p493 = scmp.lt.s32.totalorder %s25, 1
      %s494 = scalar_select %p493, %s25, 1
      %s495 = smul.addr %s494, 8
      %s496 = scalar_lea.vmem %s14, %s495
      %v497 = vld [vmem:[%s484] sm:$0xff]
      %v498 = vld [vmem:[%s488] sm:$0xff]
      %v499 = vld [vmem:[%s492] sm:$0xff]
      %v500 = vld [vmem:[%s3] sm:$0xff]
      %v501 = vld [vmem:[%s3 + $0x8] sm:$0xff]
      %v502 = vld [vmem:[%s3 + $0x10] sm:$0xff]
      %v503 = vld [vmem:[%s3 + $0x18] sm:$0xff]
      %v504 = vld [vmem:[%s4] sm:$0xff]
      %v505 = vld [vmem:[%s4 + $0x8] sm:$0xff]
      %v506 = vld [vmem:[%s4 + $0x10] sm:$0xff]
      %v507 = vld [vmem:[%s4 + $0x18] sm:$0xff]
      %v508 = vld [vmem:[%s5] sm:$0xff]
      %v509 = vld [vmem:[%s5 + $0x8] sm:$0xff]
      %v510 = vld [vmem:[%s5 + $0x10] sm:$0xff]
      %v511 = vld [vmem:[%s5 + $0x18] sm:$0xff]
      %vm512 = vcmask 261120
      %v514 = vsel %vm512, %v497, 0
      %516 = vmatpush.msra.mxu0 0.0
      %517 = vmatpush.msra.mxu0 0.0
      %518 = vmatpush.msra.mxu0 0.0
      %519 = vmatpush.msra.mxu0 0.0
      %520 = vmatpush.msra.mxu0 0.0
      %521 = vmatpush.msra.mxu0 0.0
      %522 = vmatpush.msra.mxu0 0.0
      %523 = vmatpush.msra.mxu0 0.0
      %524 = vmatpush.msra.mxu0 0.0
      %525 = vmatpush.msra.mxu0 0.0
      %526 = vmatpush.msra.mxu0 0.0
      %527 = vmatpush.msra.mxu0 0.0
      %528 = vmatpush.msra.mxu0 %v503
      %529 = vmatpush.msra.mxu0 %v502
      %530 = vmatpush.msra.mxu0 %v501
      %531 = vmatpush.msra.mxu0 %v500
      %532 = vmatmul.f32.gmra.mxu0 %v514
      %v533 = vpop.f32.mrf.mxu0
      %v534 = vadd.f32 0.0, %v533
      %535 = vdwg.mxu0
      %v536 = vmul.f32 %v534, 0.17677669
      %v538 = vsel %vm512, %v498, 0
      %540 = vmatpush.msra.mxu0 0.0
      %541 = vmatpush.msra.mxu0 0.0
      %542 = vmatpush.msra.mxu0 0.0
      %543 = vmatpush.msra.mxu0 0.0
      %544 = vmatpush.msra.mxu0 0.0
      %545 = vmatpush.msra.mxu0 0.0
      %546 = vmatpush.msra.mxu0 0.0
      %547 = vmatpush.msra.mxu0 0.0
      %548 = vmatpush.msra.mxu0 0.0
      %549 = vmatpush.msra.mxu0 0.0
      %550 = vmatpush.msra.mxu0 0.0
      %551 = vmatpush.msra.mxu0 0.0
      %552 = vmatpush.msra.mxu0 %v507
      %553 = vmatpush.msra.mxu0 %v506
      %554 = vmatpush.msra.mxu0 %v505
      %555 = vmatpush.msra.mxu0 %v504
      %556 = vmatmul.f32.gmra.mxu0 %v538
      %v557 = vpop.f32.mrf.mxu0
      %v558 = vadd.f32 0.0, %v557
      %559 = vdwg.mxu0
      %vm560 = vcmask 64512
      %v562 = vsel %vm560, %v536, 0
      %v565 = vsel %vm560, %v558, 0
      %567 = vmatpush.xpose.msra.mxu0 0.0
      %568 = vmatpush.xpose.msra.mxu0 0.0
      %569 = vmatpush.xpose.msra.mxu0 0.0
      %570 = vmatpush.xpose.msra.mxu0 0.0
      %571 = vmatpush.xpose.msra.mxu0 0.0
      %572 = vmatpush.xpose.msra.mxu0 0.0
      %573 = vmatpush.xpose.msra.mxu0 0.0
      %574 = vmatpush.xpose.msra.mxu0 0.0
      %575 = vmatpush.xpose.msra.mxu0 0.0
      %576 = vmatpush.xpose.msra.mxu0 0.0
      %577 = vmatpush.xpose.msra.mxu0 0.0
      %578 = vmatpush.xpose.msra.mxu0 0.0
      %579 = vmatpush.xpose.msra.mxu0 0.0
      %580 = vmatpush.xpose.msra.mxu0 0.0
      %581 = vmatpush.xpose.msra.mxu0 0.0
      %582 = vmatpush.xpose.msra.mxu0 %v565
      %583 = vmatmul.f32.gmra.mxu0 %v562
      %v584 = vpop.f32.mrf.mxu0
      %v585 = vadd.f32 %v499, %v584
      %586 = vdwg.mxu0
      %v587 = vsel %vm560, %v585, -inf
      %588 = vmax.xlane.f32.xlu0 %v587
      %v589 = vpop.xlane.xlu0 %588
      %v590 = vsub.f32 %v585, %v589
      %v591 = vmul.f32 %v590, 1.442695
      %v592 = vpow.pop %v591
      %v593 = vsel %vm560, %v592, 0.0
      %594 = vadd.xlane.f32.xlu0 %v593
      %v595 = vpop.xlane.xlu0 %594
      %v596 = vrcp.pop %v595
      %v597 = vmul.f32 %v592, %v596
      %598 = vrot.lane.b32.xlu0 %v558, 96
      %v599 = vpop.permute.xlu0 %598
      %v602 = vsel %vm560, %v597, 0
      %604 = vmatpush.msra.mxu0 0.0
      %605 = vmatpush.msra.mxu0 0.0
      %606 = vmatpush.msra.mxu0 0.0
      %607 = vmatpush.msra.mxu0 0.0
      %608 = vmatpush.msra.mxu0 0.0
      %609 = vmatpush.msra.mxu0 0.0
      %610 = vmatpush.msra.mxu0 0.0
      %611 = vmatpush.msra.mxu0 0.0
      %612 = vmatpush.msra.mxu0 0.0
      %613 = vmatpush.msra.mxu0 0.0
      %614 = vmatpush.msra.mxu0 0.0
      %615 = vmatpush.msra.mxu0 0.0
      %616 = vmatpush.msra.mxu0 0.0
      %617 = vmatpush.msra.mxu0 0.0
      %618 = vmatpush.msra.mxu0 0.0
      %619 = vmatpush.msra.mxu0 %v599
      %620 = vmatmul.f32.gmra.mxu0 %v602
      %v621 = vpop.f32.mrf.mxu0
      %v622 = vadd.f32 0.0, %v621
      %623 = vdwg.mxu0
      %624 = vrot.lane.b32.xlu0 %v536, 120
      %v625 = vpop.permute.xlu0 %624
      %626 = vrot.lane.b32.xlu0 %v558, 120
      %v627 = vpop.permute.xlu0 %626
      %v628 = vsel %vm560, %v625, 0
      %v630 = vsel %vm560, %v627, 0
      %632 = vmatpush.xpose.msra.mxu0 0.0
      %633 = vmatpush.xpose.msra.mxu0 0.0
      %634 = vmatpush.xpose.msra.mxu0 0.0
      %635 = vmatpush.xpose.msra.mxu0 0.0
      %636 = vmatpush.xpose.msra.mxu0 0.0
      %637 = vmatpush.xpose.msra.mxu0 0.0
      %638 = vmatpush.xpose.msra.mxu0 0.0
      %639 = vmatpush.xpose.msra.mxu0 0.0
      %640 = vmatpush.xpose.msra.mxu0 0.0
      %641 = vmatpush.xpose.msra.mxu0 0.0
      %642 = vmatpush.xpose.msra.mxu0 0.0
      %643 = vmatpush.xpose.msra.mxu0 0.0
      %644 = vmatpush.xpose.msra.mxu0 0.0
      %645 = vmatpush.xpose.msra.mxu0 0.0
      %646 = vmatpush.xpose.msra.mxu0 0.0
      %647 = vmatpush.xpose.msra.mxu0 %v630
      %648 = vmatmul.f32.gmra.mxu0 %v628
      %v649 = vpop.f32.mrf.mxu0
      %v650 = vadd.f32 %v499, %v649
      %651 = vdwg.mxu0
      %v652 = vsel %vm560, %v650, -inf
      %653 = vmax.xlane.f32.xlu0 %v652
      %v654 = vpop.xlane.xlu0 %653
      %v655 = vsub.f32 %v650, %v654
      %v656 = vmul.f32 %v655, 1.442695
      %v657 = vpow.pop %v656
      %v658 = vsel %vm560, %v657, 0.0
      %659 = vadd.xlane.f32.xlu0 %v658
      %v660 = vpop.xlane.xlu0 %659
      %v661 = vrcp.pop %v660
      %v662 = vmul.f32 %v657, %v661
      %663 = vrot.lane.b32.xlu0 %v558, 88
      %v664 = vpop.permute.xlu0 %663
      %v667 = vsel %vm560, %v662, 0
      %669 = vmatpush.msra.mxu0 0.0
      %670 = vmatpush.msra.mxu0 0.0
      %671 = vmatpush.msra.mxu0 0.0
      %672 = vmatpush.msra.mxu0 0.0
      %673 = vmatpush.msra.mxu0 0.0
      %674 = vmatpush.msra.mxu0 0.0
      %675 = vmatpush.msra.mxu0 0.0
      %676 = vmatpush.msra.mxu0 0.0
      %677 = vmatpush.msra.mxu0 0.0
      %678 = vmatpush.msra.mxu0 0.0
      %679 = vmatpush.msra.mxu0 0.0
      %680 = vmatpush.msra.mxu0 0.0
      %681 = vmatpush.msra.mxu0 0.0
      %682 = vmatpush.msra.mxu0 0.0
      %683 = vmatpush.msra.mxu0 0.0
      %684 = vmatpush.msra.mxu0 %v664
      %685 = vmatmul.f32.gmra.mxu0 %v667
      %v686 = vpop.f32.mrf.mxu0
      %v687 = vadd.f32 0.0, %v686
      %688 = vdwg.mxu0
      %689 = vrot.lane.b32.xlu0 %v536, 112
      %v690 = vpop.permute.xlu0 %689
      %691 = vrot.lane.b32.xlu0 %v558, 112
      %v692 = vpop.permute.xlu0 %691
      %v693 = vsel %vm560, %v690, 0
      %v695 = vsel %vm560, %v692, 0
      %697 = vmatpush.xpose.msra.mxu0 0.0
      %698 = vmatpush.xpose.msra.mxu0 0.0
      %699 = vmatpush.xpose.msra.mxu0 0.0
      %700 = vmatpush.xpose.msra.mxu0 0.0
      %701 = vmatpush.xpose.msra.mxu0 0.0
      %702 = vmatpush.xpose.msra.mxu0 0.0
      %703 = vmatpush.xpose.msra.mxu0 0.0
      %704 = vmatpush.xpose.msra.mxu0 0.0
      %705 = vmatpush.xpose.msra.mxu0 0.0
      %706 = vmatpush.xpose.msra.mxu0 0.0
      %707 = vmatpush.xpose.msra.mxu0 0.0
      %708 = vmatpush.xpose.msra.mxu0 0.0
      %709 = vmatpush.xpose.msra.mxu0 0.0
      %710 = vmatpush.xpose.msra.mxu0 0.0
      %711 = vmatpush.xpose.msra.mxu0 0.0
      %712 = vmatpush.xpose.msra.mxu0 %v695
      %713 = vmatmul.f32.gmra.mxu0 %v693
      %v714 = vpop.f32.mrf.mxu0
      %v715 = vadd.f32 %v499, %v714
      %716 = vdwg.mxu0
      %v717 = vsel %vm560, %v715, -inf
      %718 = vmax.xlane.f32.xlu0 %v717
      %v719 = vpop.xlane.xlu0 %718
      %v720 = vsub.f32 %v715, %v719
      %v721 = vmul.f32 %v720, 1.442695
      %v722 = vpow.pop %v721
      %v723 = vsel %vm560, %v722, 0.0
      %724 = vadd.xlane.f32.xlu0 %v723
      %v725 = vpop.xlane.xlu0 %724
      %v726 = vrcp.pop %v725
      %v727 = vmul.f32 %v722, %v726
      %728 = vrot.lane.b32.xlu0 %v558, 80
      %v729 = vpop.permute.xlu0 %728
      %v732 = vsel %vm560, %v727, 0
      %734 = vmatpush.msra.mxu0 0.0
      %735 = vmatpush.msra.mxu0 0.0
      %736 = vmatpush.msra.mxu0 0.0
      %737 = vmatpush.msra.mxu0 0.0
      %738 = vmatpush.msra.mxu0 0.0
      %739 = vmatpush.msra.mxu0 0.0
      %740 = vmatpush.msra.mxu0 0.0
      %741 = vmatpush.msra.mxu0 0.0
      %742 = vmatpush.msra.mxu0 0.0
      %743 = vmatpush.msra.mxu0 0.0
      %744 = vmatpush.msra.mxu0 0.0
      %745 = vmatpush.msra.mxu0 0.0
      %746 = vmatpush.msra.mxu0 0.0
      %747 = vmatpush.msra.mxu0 0.0
      %748 = vmatpush.msra.mxu0 0.0
      %749 = vmatpush.msra.mxu0 %v729
      %750 = vmatmul.f32.gmra.mxu0 %v732
      %v751 = vpop.f32.mrf.mxu0
      %v752 = vadd.f32 0.0, %v751
      %753 = vdwg.mxu0
      %754 = vrot.lane.b32.xlu0 %v536, 104
      %v755 = vpop.permute.xlu0 %754
      %756 = vrot.lane.b32.xlu0 %v558, 104
      %v757 = vpop.permute.xlu0 %756
      %v758 = vsel %vm560, %v755, 0
      %v760 = vsel %vm560, %v757, 0
      %762 = vmatpush.xpose.msra.mxu0 0.0
      %763 = vmatpush.xpose.msra.mxu0 0.0
      %764 = vmatpush.xpose.msra.mxu0 0.0
      %765 = vmatpush.xpose.msra.mxu0 0.0
      %766 = vmatpush.xpose.msra.mxu0 0.0
      %767 = vmatpush.xpose.msra.mxu0 0.0
      %768 = vmatpush.xpose.msra.mxu0 0.0
      %769 = vmatpush.xpose.msra.mxu0 0.0
      %770 = vmatpush.xpose.msra.mxu0 0.0
      %771 = vmatpush.xpose.msra.mxu0 0.0
      %772 = vmatpush.xpose.msra.mxu0 0.0
      %773 = vmatpush.xpose.msra.mxu0 0.0
      %774 = vmatpush.xpose.msra.mxu0 0.0
      %775 = vmatpush.xpose.msra.mxu0 0.0
      %776 = vmatpush.xpose.msra.mxu0 0.0
      %777 = vmatpush.xpose.msra.mxu0 %v760
      %778 = vmatmul.f32.gmra.mxu0 %v758
      %v779 = vpop.f32.mrf.mxu0
      %v780 = vadd.f32 %v499, %v779
      %781 = vdwg.mxu0
      %v782 = vsel %vm560, %v780, -inf
      %783 = vmax.xlane.f32.xlu0 %v782
      %v784 = vpop.xlane.xlu0 %783
      %v785 = vsub.f32 %v780, %v784
      %v786 = vmul.f32 %v785, 1.442695
      %v787 = vpow.pop %v786
      %v788 = vsel %vm560, %v787, 0.0
      %789 = vadd.xlane.f32.xlu0 %v788
      %v790 = vpop.xlane.xlu0 %789
      %v791 = vrcp.pop %v790
      %v792 = vmul.f32 %v787, %v791
      %793 = vrot.lane.b32.xlu0 %v558, 72
      %v794 = vpop.permute.xlu0 %793
      %v797 = vsel %vm560, %v792, 0
      %799 = vmatpush.msra.mxu0 0.0
      %800 = vmatpush.msra.mxu0 0.0
      %801 = vmatpush.msra.mxu0 0.0
      %802 = vmatpush.msra.mxu0 0.0
      %803 = vmatpush.msra.mxu0 0.0
      %804 = vmatpush.msra.mxu0 0.0
      %805 = vmatpush.msra.mxu0 0.0
      %806 = vmatpush.msra.mxu0 0.0
      %807 = vmatpush.msra.mxu0 0.0
      %808 = vmatpush.msra.mxu0 0.0
      %809 = vmatpush.msra.mxu0 0.0
      %810 = vmatpush.msra.mxu0 0.0
      %811 = vmatpush.msra.mxu0 0.0
      %812 = vmatpush.msra.mxu0 0.0
      %813 = vmatpush.msra.mxu0 0.0
      %814 = vmatpush.msra.mxu0 %v794
      %815 = vmatmul.f32.gmra.mxu0 %v797
      %v816 = vpop.f32.mrf.mxu0
      %v817 = vadd.f32 0.0, %v816
      %818 = vdwg.mxu0
      %820 = vrot.lane.b32.xlu0 %v687, 8
      %v821 = vpop.permute.xlu0 %820
      %824 = vrot.lane.b32.xlu0 %v752, 16
      %v825 = vpop.permute.xlu0 %824
      %828 = vrot.lane.b32.xlu0 %v817, 24
      %v829 = vpop.permute.xlu0 %828
      %v831 = vsel %vm560, %v622, %v821
      %vm832 = vcmask 130048
      %v833 = vsel %vm832, %v831, %v825
      %vm834 = vcmask 195584
      %v835 = vsel %vm834, %v833, %v829
      %v836 = vld [vmem:[%s6] sm:$0x1]
      %v837 = vld [vmem:[%s7] sm:$0x1]
      %v839 = vsel %vm512, %v835, 0
      %841 = vmatpush.msra.mxu0 0.0
      %842 = vmatpush.msra.mxu0 0.0
      %843 = vmatpush.msra.mxu0 0.0
      %844 = vmatpush.msra.mxu0 0.0
      %845 = vmatpush.msra.mxu0 0.0
      %846 = vmatpush.msra.mxu0 0.0
      %847 = vmatpush.msra.mxu0 0.0
      %848 = vmatpush.msra.mxu0 0.0
      %849 = vmatpush.msra.mxu0 0.0
      %850 = vmatpush.msra.mxu0 0.0
      %851 = vmatpush.msra.mxu0 0.0
      %852 = vmatpush.msra.mxu0 0.0
      %853 = vmatpush.msra.mxu0 %v511
      %854 = vmatpush.msra.mxu0 %v510
      %855 = vmatpush.msra.mxu0 %v509
      %856 = vmatpush.msra.mxu0 %v508
      %857 = vmatmul.f32.gmra.mxu0 %v839
      %v858 = vpop.f32.mrf.mxu0
      %v859 = vadd.f32 %v497, %v858
      %860 = vdwg.mxu0
      %v861 = vsel %vm512, %v859, 0.0
      %862 = vadd.xlane.f32.xlu0 %v861
      %v863 = vpop.xlane.xlu0 %862
      %v864 = vrcp.pop 32.0
      %v865 = vmul.f32 32.0, %v864
      %v866 = vsub.f32 1.0, %v865
      %v867 = vmul.f32 %v864, %v866
      %v868 = vadd.f32 %v864, %v867
      %vm869 = vweird.f32 %v864
      %v870 = vsel %vm869, %v864, %v868
      %v871 = vmul.f32 %v863, %v870
      %v872 = vsub.f32 %v859, %v871
      %v873 = vmul.f32 %v872, %v872
      %v874 = vsel %vm512, %v873, 0.0
      %875 = vadd.xlane.f32.xlu0 %v874
      %v876 = vpop.xlane.xlu0 %875
      %v877 = vmul.f32 %v876, %v870
      %v878 = vadd.f32 %v877, 1e-05
      %v879 = vrsqrt.pop %v878
      %v880 = vmul.f32 %v879, %v878
      %v881 = vmul.f32 %v880, %v879
      %v882 = vmul.f32 0.5, %v881
      %v883 = vsub.f32 1.5, %v882
      %v884 = vmul.f32 %v879, %v883
      %vm885 = vweird.f32 %v878
      %vm886 = vweird.f32 %v879
      %vm887 = vmor %vm885, %vm886
      %v888 = vsel %vm887, %v879, %v884
      %v889 = vmul.f32 %v872, %v888
      %v891 = vperm.slane %v836, 0
      %v893 = vmul.f32 %v889, %v891
      %v895 = vperm.slane %v837, 0
      %v897 = vadd.f32 %v893, %v895
      %v898 = vld [vmem:[%s8] sm:$0xff]
      %v899 = vld [vmem:[%s8 + $0x8] sm:$0xff]
      %v900 = vld [vmem:[%s8 + $0x10] sm:$0xff]
      %v901 = vld [vmem:[%s8 + $0x18] sm:$0xff]
      %v902 = vld [vmem:[%s9] sm:$0x1]
      %v904 = vperm.slane %v902, 0
      %v907 = vsel %vm512, %v897, 0
      %909 = vmatpush.msra.mxu0 0.0
      %910 = vmatpush.msra.mxu0 0.0
      %911 = vmatpush.msra.mxu0 0.0
      %912 = vmatpush.msra.mxu0 0.0
      %913 = vmatpush.msra.mxu0 0.0
      %914 = vmatpush.msra.mxu0 0.0
      %915 = vmatpush.msra.mxu0 0.0
      %916 = vmatpush.msra.mxu0 0.0
      %917 = vmatpush.msra.mxu0 0.0
      %918 = vmatpush.msra.mxu0 0.0
      %919 = vmatpush.msra.mxu0 0.0
      %920 = vmatpush.msra.mxu0 0.0
      %921 = vmatpush.msra.mxu0 %v901
      %922 = vmatpush.msra.mxu0 %v900
      %923 = vmatpush.msra.mxu0 %v899
      %924 = vmatpush.msra.mxu0 %v898
      %925 = vmatmul.f32.gmra.mxu0 %v907
      %v926 = vpop.f32.mrf.mxu0
      %v927 = vadd.f32 %v904, %v926
      %928 = vdwg.mxu0
      %v929 = vmax.f32 %v927, 0.0
      %v930 = vld [vmem:[%s10] sm:$0xff]
      %v931 = vld [vmem:[%s10 + $0x8] sm:$0xff]
      %v932 = vld [vmem:[%s10 + $0x10] sm:$0xff]
      %v933 = vld [vmem:[%s10 + $0x18] sm:$0xff]
      %v934 = vld [vmem:[%s10 + $0x20] sm:$0xff]
      %v935 = vld [vmem:[%s10 + $0x28] sm:$0xff]
      %v936 = vld [vmem:[%s10 + $0x30] sm:$0xff]
      %v937 = vld [vmem:[%s10 + $0x38] sm:$0xff]
      %v938 = vld [vmem:[%s10 + $0x40] sm:$0xff]
      %v939 = vld [vmem:[%s10 + $0x48] sm:$0xff]
      %v940 = vld [vmem:[%s10 + $0x50] sm:$0xff]
      %v941 = vld [vmem:[%s10 + $0x58] sm:$0xff]
      %v942 = vld [vmem:[%s10 + $0x60] sm:$0xff]
      %v943 = vld [vmem:[%s10 + $0x68] sm:$0xff]
      %v944 = vld [vmem:[%s10 + $0x70] sm:$0xff]
      %v945 = vld [vmem:[%s10 + $0x78] sm:$0xff]
      %v946 = vld [vmem:[%s11] sm:$0x1]
      %v948 = vperm.slane %v946, 0
      %950 = vmatpush.msra.mxu0 %v945
      %951 = vmatpush.msra.mxu0 %v944
      %952 = vmatpush.msra.mxu0 %v943
      %953 = vmatpush.msra.mxu0 %v942
      %954 = vmatpush.msra.mxu0 %v941
      %955 = vmatpush.msra.mxu0 %v940
      %956 = vmatpush.msra.mxu0 %v939
      %957 = vmatpush.msra.mxu0 %v938
      %958 = vmatpush.msra.mxu0 %v937
      %959 = vmatpush.msra.mxu0 %v936
      %960 = vmatpush.msra.mxu0 %v935
      %961 = vmatpush.msra.mxu0 %v934
      %962 = vmatpush.msra.mxu0 %v933
      %963 = vmatpush.msra.mxu0 %v932
      %964 = vmatpush.msra.mxu0 %v931
      %965 = vmatpush.msra.mxu0 %v930
      %966 = vmatmul.f32.gmra.mxu0 %v929
      %v967 = vpop.f32.mrf.mxu0
      %v968 = vadd.f32 %v948, %v967
      %969 = vdwg.mxu0
      %v970 = vld [vmem:[%s12] sm:$0x1]
      %v971 = vld [vmem:[%s13] sm:$0x1]
      %v972 = vadd.f32 %v897, %v968
      %v973 = vsel %vm512, %v972, 0.0
      %974 = vadd.xlane.f32.xlu0 %v973
      %v975 = vpop.xlane.xlu0 %974
      %v976 = vmul.f32 %v975, %v870
      %v977 = vsub.f32 %v972, %v976
      %v978 = vmul.f32 %v977, %v977
      %v979 = vsel %vm512, %v978, 0.0
      %980 = vadd.xlane.f32.xlu0 %v979
      %v981 = vpop.xlane.xlu0 %980
      %v982 = vmul.f32 %v981, %v870
      %v983 = vadd.f32 %v982, 1e-05
      %v984 = vrsqrt.pop %v983
      %v985 = vmul.f32 %v984, %v983
      %v986 = vmul.f32 %v985, %v984
      %v987 = vmul.f32 0.5, %v986
      %v988 = vsub.f32 1.5, %v987
      %v989 = vmul.f32 %v984, %v988
      %vm990 = vweird.f32 %v983
      %vm991 = vweird.f32 %v984
      %vm992 = vmor %vm990, %vm991
      %v993 = vsel %vm992, %v984, %v989
      %v994 = vmul.f32 %v977, %v993
      %v996 = vperm.slane %v970, 0
      %v998 = vmul.f32 %v994, %v996
      %v1000 = vperm.slane %v971, 0
      %v1002 = vadd.f32 %v998, %v1000
      %1003 = vst.msk [vmem:[%s496] sm:$0xff] %vm512, %v1002
      %p1004 = scmp.lt.s32.totalorder %s25, 1
      %s1005 = scalar_select %p1004, %s25, 1
      %s1006 = smul.addr %s1005, 8
      %s1007 = scalar_lea.vmem %s14, %s1006
      // Predicated region
      $region77: #{_lambda_.7} parent=75 // pred_check
        %p1008 = pneg %p352
      $region78: #{_lambda_.7} parent=75 // pred_check_branch
        %1010 = sbr.rel (%p1008) target = $region80
      $region79: #{_lambda_.7} parent=75 // pred_region
        _
      $region80: #{_lambda_.7} parent=75 // pred_fallthru
        _
    $region76: #{_lambda_.7} parent=5 // pred_fallthru
      _
    %p1011 = scmp.le.s32.totalorder 2, %s20
    // Predicated region
    $region81: #{_lambda_.7} parent=5 // pred_check
      %p1012 = pneg %p1011
    $region82: #{_lambda_.7} parent=5 // pred_check_branch
      %1014 = sbr.rel (%p1012) target = $region84
    $region83: #{_lambda_.7} parent=5 // pred_region
      %s1015 = ssub.s32 %s20, 2
      // Predicated region
      $region85: #{_lambda_.7} parent=83 // pred_check
        %p1016 = pneg %p358
      $region86: #{_lambda_.7} parent=83 // pred_check_branch
        %1018 = sbr.rel (%p1016) target = $region88
      $region87: #{_lambda_.7} parent=83 // pred_region
        %p1019 = scmp.lt.s32.totalorder %s26, 1
        %s1020 = scalar_select %p1019, %s26, 1
        %s1021 = smul.addr %s1020, 8
        %s1022 = scalar_lea.vmem %s14, %s1021
      $region88: #{_lambda_.7} parent=83 // pred_fallthru
        _
    $region84: #{_lambda_.7} parent=5 // pred_fallthru
      _
  $region6: #{_lambda_.7} parent=0 // loop_footer
    %s24 = sadd.s32 1, %s20
  $region7: #{_lambda_.7} parent=0 // loop_footer_branch
    %19 = sbr.rel target = $region3
  $region8: #{_lambda_.7} parent=0 // loop_exit
    _

</llo_original>
